<compile_context>
chip_gen: v5e
topology: v5e:2x2
jax: 0.10.0
libtpu: 0.0.40
codegen_flags: <defaults>
</compile_context>

<pallas_src>
import functools

import jax
import jax.numpy as jnp
import numpy as np
from jax import lax
from jax.experimental import pallas as pl
from jax.experimental.pallas import tpu as pltpu


# ----------------------------------------------------------------------------
# Pallas kernel: grid = (batch, query tiles), both axes "parallel".
# ----------------------------------------------------------------------------
def mhca_kernel(
    src_ref,    # [1, tq, D]  bf16  src_fea tile (queries + residual)
    tgt_ref,    # [1, M, D]   bf16  tgt_fea (keys / values source)
    idx_ref,    # [1, tq, k]  int32 KNN indices into tgt
    wqkv_ref,   # [3, D, D]   bf16  [Wq.T * scale ; Wk.T ; Wv.T]
    bqkv_ref,   # [3, D]      f32   [bq * scale ; bk ; bv]
    wo1h_ref,   # [H, dk, D]  bf16  Wo1.T split per head (rows h*dk:(h+1)*dk)
    wo_ref,     # [2, D, D]   bf16  [Wo1.T ; Wo2.T]
    misc_ref,   # [4, D]      f32   [bo1 ; ln_gamma ; ln_beta ; bo2]
    out_ref,    # [1, tq, D]  f32   updated src features
    avg_ref,    # [1, tq, M]  f32   head-averaged attention weights
    *,
    num_heads: int,
    k_nn: int,
):
    H = num_heads
    src = src_ref[0]                     # [tq, D] bf16
    tgt = tgt_ref[0]                     # [M, D]  bf16
    tq, D = src.shape
    M = tgt.shape[0]
    dk = D // H

    # ---- Q/K/V projections: full-D contraction, bf16 MXU, f32 accumulate ----
    # (softmax scale is pre-folded into wqkv_ref[0] / bqkv_ref[0] by wrapper)
    q = jnp.dot(src, wqkv_ref[0], preferred_element_type=jnp.float32) + bqkv_ref[0:1]
    k = jnp.dot(tgt, wqkv_ref[1], preferred_element_type=jnp.float32) + bqkv_ref[1:2]
    v = jnp.dot(tgt, wqkv_ref[2], preferred_element_type=jnp.float32) + bqkv_ref[2:3]

    # ---- head-major [H, rows, dk] (one pack per tensor; slices become free
    #      views once dk is a 128-lane multiple) ----
    qh = jnp.stack([q[:, h * dk:(h + 1) * dk] for h in range(H)], 0).astype(jnp.bfloat16)
    kh = jnp.stack([k[:, h * dk:(h + 1) * dk] for h in range(H)], 0).astype(jnp.bfloat16)
    vh = jnp.stack([v[:, h * dk:(h + 1) * dk] for h in range(H)], 0).astype(jnp.bfloat16)

    # ---- KNN additive bias rebuilt on-chip from the [tq, k] index list ----
    idx = idx_ref[0]                                        # [tq, k] int32
    col = lax.broadcasted_iota(jnp.int32, (tq, M), 1)       # [tq, M]
    mask = col == idx[:, 0:1]
    for j in range(1, k_nn):
        mask = jnp.logical_or(mask, col == idx[:, j:j + 1])
    bias = jnp.where(mask, 0.0, -1e30).astype(jnp.float32)  # [tq, M], f32 only

    # ---- ONE batched score matmul over all heads; bias broadcast over H ----
    scores = jnp.einsum("hqd,hkd->hqk", qh, kh,
                        preferred_element_type=jnp.float32) + bias[None]

    # ---- single softmax pass across all heads (EUP reciprocal + Newton) ----
    smax = jnp.max(scores, axis=-1, keepdims=True)
    p = jnp.exp(scores - smax)                   # masked entries underflow to 0
    denom = jnp.sum(p, axis=-1, keepdims=True)   # >= exp(0) = 1 since k_nn >= 1
    inv = pl.reciprocal(denom, approx=True)
    inv = inv * (2.0 - denom * inv)              # one Newton step -> ~f32 exact
    w = p * inv                                  # [H, tq, M] f32

    # ---- head-averaged attention weights (constant multiply, no divide) ----
    avg_ref[0] = jnp.sum(w, axis=0) * (1.0 / H)

    # ---- ONE batched attention-output matmul ----
    o = jnp.einsum("hqk,hkd->hqd", w.astype(jnp.bfloat16), vh,
                   preferred_element_type=jnp.float32)       # [H, tq, dk]

    # ---- residual + first output Linear with the head-concat folded in:
    #      (concat_h(o_h) + src) @ Wo1T == src @ Wo1T + sum_h o_h @ Wo1T[h] ----
    attn_proj = jnp.sum(
        jnp.einsum("hqd,hde->hqe", o.astype(jnp.bfloat16), wo1h_ref[...],
                   preferred_element_type=jnp.float32),
        axis=0)                                              # [tq, D]
    h1 = (jnp.dot(src, wo_ref[0], preferred_element_type=jnp.float32)
          + attn_proj + misc_ref[0:1])

    # ---- LayerNorm (f32) -> ReLU -> final Linear ----
    mu = jnp.mean(h1, axis=-1, keepdims=True)
    var = jnp.mean((h1 - mu) * (h1 - mu), axis=-1, keepdims=True)
    ln = (h1 - mu) * lax.rsqrt(var + 1e-5) * misc_ref[1:2] + misc_ref[2:3]
    relu = jnp.maximum(ln, 0.0).astype(jnp.bfloat16)
    out_ref[0] = (jnp.dot(relu, wo_ref[1], preferred_element_type=jnp.float32)
                  + misc_ref[3:4])


# ----------------------------------------------------------------------------
# Wrapper: KNN indices + packed bf16 params (glue), then the Pallas kernel.
# ----------------------------------------------------------------------------
def mhca_forward(src, tgt, src_fea, tgt_fea, params, *, num_heads, k):
    B, N, D = src_fea.shape
    M = tgt.shape[1]
    H = num_heads
    assert D % H == 0, "input_dim must be divisible by num_heads"
    dk = D // H
    scale = float(dk) ** -0.5

    # KNN (cdist + top_k) stays as plain-JAX glue; only the [B, N, k] int32
    # index list crosses into the kernel (the dense mask is rebuilt on-chip).
    diff = src[:, :, None, :] - tgt[:, None, :, :]
    dist = jnp.sqrt(jnp.sum(diff * diff, axis=-1))           # [B, N, M]
    _, idx = lax.top_k(-dist, k)                              # k smallest
    idx = idx.astype(jnp.int32)                               # [B, N, k]

    (wq, bq, wk, bk, wv, bv, wo1, bo1, g, beta, wo2, bo2) = params

    # One-time parameter prep (would happen at init in a real deployment):
    # pre-transpose, fold the softmax scale into Q, cast matmul operands bf16.
    w_qkv_t = jnp.stack([wq.T * scale, wk.T, wv.T], 0).astype(jnp.bfloat16)  # [3,D,D]
    b_qkv = jnp.concatenate([bq * scale, bk, bv], 0).astype(jnp.float32)     # [3,D]
    wo1_t = wo1.T
    wo1_heads = wo1_t.reshape(H, dk, D).astype(jnp.bfloat16)                 # [H,dk,D]
    w_out_t = jnp.stack([wo1_t, wo2.T], 0).astype(jnp.bfloat16)              # [2,D,D]
    p_misc = jnp.concatenate([bo1, g, beta, bo2], 0).astype(jnp.float32)     # [4,D]

    src_bf = src_fea.astype(jnp.bfloat16)
    tgt_bf = tgt_fea.astype(jnp.bfloat16)

    # Query-tile grid axis over N (second "parallel" axis besides batch).
    tq = 128 if (N % 128 == 0) else N
    nt = N // tq

    # Cost hint for XLA scheduling around the kernel.
    flops = 2 * B * (D * D * (N + 2 * M) + 2 * N * M * D + 3 * N * D * D)
    transcendentals = B * H * N * M
    bytes_accessed = (B * ((N + M) * D * 2 + N * k * 4 + N * D * 4 + N * M * 4)
                      + (5 * D * D + H * dk * D) * 2 + 7 * D * 4)
    cost = pl.CostEstimate(flops=flops, transcendentals=transcendentals,
                           bytes_accessed=bytes_accessed)

    # Raise the scoped-VMEM cap only when the estimated per-step working set
    # exceeds the per-chip defaults (with headroom); None at small shapes.
    stream = (tq * D * 2 + M * D * 2 + tq * k * 4 + tq * D * 4 + tq * M * 4)
    weights = (5 * D * D + H * dk * D) * 2 + 7 * D * 4
    interm = 4 * H * tq * M * 4 + 4 * (tq + 2 * M) * D * 4
    est = 2 * stream + 2 * weights + interm
    vmem_limit = None
    if est > (16 << 20):
        vmem_limit = min(int(est) + (16 << 20), 100 << 20)

    kernel = functools.partial(mhca_kernel, num_heads=H, k_nn=k)

    out, avg_w = pl.pallas_call(
        kernel,
        out_shape=(
            jax.ShapeDtypeStruct((B, N, D), jnp.float32),
            jax.ShapeDtypeStruct((B, N, M), jnp.float32),
        ),
        grid_spec=pltpu.PrefetchScalarGridSpec(
            num_scalar_prefetch=0,
            grid=(B, nt),
            in_specs=[
                pl.BlockSpec((1, tq, D), lambda b, n: (b, n, 0)),   # src_fea tile
                pl.BlockSpec((1, M, D), lambda b, n: (b, 0, 0)),    # tgt_fea (full)
                pl.BlockSpec((1, tq, k), lambda b, n: (b, n, 0)),   # KNN idx tile
                pl.BlockSpec((3, D, D), lambda b, n: (0, 0, 0)),    # WqT*s|WkT|WvT
                pl.BlockSpec((3, D), lambda b, n: (0, 0)),          # bq*s|bk|bv
                pl.BlockSpec((H, dk, D), lambda b, n: (0, 0, 0)),   # Wo1T head-split
                pl.BlockSpec((2, D, D), lambda b, n: (0, 0, 0)),    # Wo1T|Wo2T
                pl.BlockSpec((4, D), lambda b, n: (0, 0)),          # bo1|g|beta|bo2
            ],
            out_specs=[
                pl.BlockSpec((1, tq, D), lambda b, n: (b, n, 0)),
                pl.BlockSpec((1, tq, M), lambda b, n: (b, n, 0)),
            ],
            scratch_shapes=[],
        ),
        compiler_params=pltpu.CompilerParams(
            dimension_semantics=("parallel", "parallel"),
            vmem_limit_bytes=vmem_limit,
        ),
        cost_estimate=cost,
    )(src_bf, tgt_bf, idx, w_qkv_t, b_qkv, wo1_heads, w_out_t, p_misc)

    return out, avg_w


# ----------------------------------------------------------------------------
# Pure-JAX f32 reference (mirrors the PyTorch forward) for verification.
# ----------------------------------------------------------------------------
def mhca_reference(src, tgt, src_fea, tgt_fea, params, *, num_heads, k):
    B, N, D = src_fea.shape
    M = tgt.shape[1]
    dk = D // num_heads
    scale = float(dk) ** -0.5
    (wq, bq, wk, bk, wv, bv, wo1, bo1, g, beta, wo2, bo2) = params

    diff = src[:, :, None, :] - tgt[:, None, :, :]
    dist = jnp.sqrt(jnp.sum(diff * diff, axis=-1))
    _, idx = lax.top_k(-dist, k)
    mask = jnp.any(jax.nn.one_hot(idx, M, dtype=jnp.bool_), axis=2)   # [B, N, M]

    q = (src_fea @ wq.T + bq[0]).reshape(B, N, num_heads, dk).transpose(0, 2, 1, 3)
    kk = (tgt_fea @ wk.T + bk[0]).reshape(B, M, num_heads, dk).transpose(0, 2, 1, 3)
    v = (tgt_fea @ wv.T + bv[0]).reshape(B, M, num_heads, dk).transpose(0, 2, 1, 3)

    scores = jnp.einsum("bhnd,bhmd->bhnm", q, kk) * scale
    scores = jnp.where(mask[:, None], scores, -jnp.inf)
    w = jax.nn.softmax(scores, axis=-1)
    attn = jnp.einsum("bhnm,bhmd->bhnd", w, v).transpose(0, 2, 1, 3).reshape(B, N, D)

    z = attn + src_fea
    h1 = z @ wo1.T + bo1[0]
    mu = jnp.mean(h1, axis=-1, keepdims=True)
    var = jnp.mean((h1 - mu) ** 2, axis=-1, keepdims=True)
    ln = (h1 - mu) / jnp.sqrt(var + 1e-5) * g[0] + beta[0]
    out = jnp.maximum(ln, 0.0) @ wo2.T + bo2[0]
    return out, w.mean(axis=1)


# ----------------------------------------------------------------------------
if __name__ == "__main__":
    # Small shapes consistent with the forward: B=2, N=16, M=16, D=32, H=4, k=4.
    B, N, M, D, H, K = 2, 16, 16, 32, 4, 4

    key = jax.random.PRNGKey(0)
    keys = jax.random.split(key, 16)

    src = jax.random.normal(keys[0], (B, N, 3), jnp.float32)
    tgt = jax.random.normal(keys[1], (B, M, 3), jnp.float32)
    src_fea = jax.random.normal(keys[2], (B, N, D), jnp.float32)
    tgt_fea = jax.random.normal(keys[3], (B, M, D), jnp.float32)

    def lin(kw, kb, out_dim, in_dim):
        w = jax.random.normal(kw, (out_dim, in_dim), jnp.float32) * (in_dim ** -0.5)
        b = jax.random.normal(kb, (1, out_dim), jnp.float32) * 0.01
        return w, b

    wq, bq = lin(keys[4], keys[5], D, D)
    wk, bk = lin(keys[6], keys[7], D, D)
    wv, bv = lin(keys[8], keys[9], D, D)
    wo1, bo1 = lin(keys[10], keys[11], D, D)
    gamma = jnp.ones((1, D), jnp.float32)
    beta = jnp.zeros((1, D), jnp.float32)
    wo2, bo2 = lin(keys[12], keys[13], D, D)
    params = (wq, bq, wk, bk, wv, bv, wo1, bo1, gamma, beta, wo2, bo2)

    out, avg_w = mhca_forward(src, tgt, src_fea, tgt_fea, params,
                              num_heads=H, k=K)
    jax.block_until_ready(out)
    jax.block_until_ready(avg_w)

    ref_out, ref_w = mhca_reference(src, tgt, src_fea, tgt_fea, params,
                                    num_heads=H, k=K)
    # Kernel runs its matmuls in bf16 (f32 accumulation) per the perf review;
    # tolerances are set to bf16-matmul level vs the f32 reference.
    np.testing.assert_allclose(np.asarray(out), np.asarray(ref_out),
                               rtol=1e-1, atol=1e-1)
    np.testing.assert_allclose(np.asarray(avg_w), np.asarray(ref_w),
                               rtol=5e-2, atol=2e-2)

    print("KERNEL_OK")
</pallas_src>

<mosaic_0001>
module attributes {stable_mosaic.version = 11 : i64} {
  func.func @mhca_kernel(%arg0: i32, %arg1: i32, %arg2: memref<1x16x32xbf16, #tpu.memory_space<vmem>>, %arg3: memref<1x16x32xbf16, #tpu.memory_space<vmem>>, %arg4: memref<1x16x4xi32, #tpu.memory_space<vmem>>, %arg5: memref<3x32x32xbf16, #tpu.memory_space<vmem>>, %arg6: memref<3x32xf32, #tpu.memory_space<vmem>>, %arg7: memref<4x8x32xbf16, #tpu.memory_space<vmem>>, %arg8: memref<2x32x32xbf16, #tpu.memory_space<vmem>>, %arg9: memref<4x32xf32, #tpu.memory_space<vmem>>, %arg10: memref<1x16x32xf32, #tpu.memory_space<vmem>>, %arg11: memref<1x16x16xf32, #tpu.memory_space<vmem>>) attributes {dimension_semantics = [#tpu.dimension_semantics<parallel>, #tpu.dimension_semantics<parallel>], iteration_bounds = array<i64: 2, 1>, scalar_prefetch = 0 : i64, scratch_operands = 0 : i64, tpu.core_type = #tpu.core_type<tc>, window_params = [{transform_indices = @transform_0, window_bounds = array<i64: 1, 16, 32>}, {transform_indices = @transform_1, window_bounds = array<i64: 1, 16, 32>}, {transform_indices = @transform_2, window_bounds = array<i64: 1, 16, 4>}, {pipeline_mode = #tpu.pipeline_mode<synchronous>, transform_indices = @transform_3, window_bounds = array<i64: 3, 32, 32>}, {pipeline_mode = #tpu.pipeline_mode<synchronous>, transform_indices = @transform_4, window_bounds = array<i64: 3, 32>}, {pipeline_mode = #tpu.pipeline_mode<synchronous>, transform_indices = @transform_5, window_bounds = array<i64: 4, 8, 32>}, {pipeline_mode = #tpu.pipeline_mode<synchronous>, transform_indices = @transform_6, window_bounds = array<i64: 2, 32, 32>}, {pipeline_mode = #tpu.pipeline_mode<synchronous>, transform_indices = @transform_7, window_bounds = array<i64: 4, 32>}, {transform_indices = @transform_8, window_bounds = array<i64: 1, 16, 32>}, {transform_indices = @transform_9, window_bounds = array<i64: 1, 16, 16>}]} {
    %c0 = arith.constant 0 : index
    %c0_0 = arith.constant 0 : index
    %c0_1 = arith.constant 0 : index
    %0 = vector.load %arg2[%c0, %c0_0, %c0_1] : memref<1x16x32xbf16, #tpu.memory_space<vmem>>, vector<1x16x32xbf16>
    %1 = vector.shape_cast %0 : vector<1x16x32xbf16> to vector<16x32xbf16>
    %c0_2 = arith.constant 0 : index
    %c0_3 = arith.constant 0 : index
    %c0_4 = arith.constant 0 : index
    %2 = vector.load %arg3[%c0_2, %c0_3, %c0_4] : memref<1x16x32xbf16, #tpu.memory_space<vmem>>, vector<1x16x32xbf16>
    %3 = vector.shape_cast %2 : vector<1x16x32xbf16> to vector<16x32xbf16>
    %c0_5 = arith.constant 0 : index
    %c0_6 = arith.constant 0 : index
    %c0_7 = arith.constant 0 : index
    %4 = vector.load %arg5[%c0_5, %c0_6, %c0_7] : memref<3x32x32xbf16, #tpu.memory_space<vmem>>, vector<1x32x32xbf16>
    %5 = vector.shape_cast %4 : vector<1x32x32xbf16> to vector<32x32xbf16>
    %cst = arith.constant dense<0.000000e+00> : vector<16x32xf32>
    %6 = tpu.matmul %1, %5, %cst {dimension_numbers = #tpu.dot_dimension_numbers<[1], [0], [0], [1], [0, 0, 1, 1], [], []>} : vector<16x32xbf16>, vector<32x32xbf16>, vector<16x32xf32> -> vector<16x32xf32>
    %c0_8 = arith.constant 0 : index
    %c0_9 = arith.constant 0 : index
    %7 = vector.load %arg6[%c0_8, %c0_9] : memref<3x32xf32, #tpu.memory_space<vmem>>, vector<1x32xf32>
    %8 = vector.broadcast %7 : vector<1x32xf32> to vector<16x32xf32>
    %9 = arith.addf %6, %8 : vector<16x32xf32>
    %c1 = arith.constant 1 : index
    %c0_10 = arith.constant 0 : index
    %c0_11 = arith.constant 0 : index
    %10 = vector.load %arg5[%c1, %c0_10, %c0_11] : memref<3x32x32xbf16, #tpu.memory_space<vmem>>, vector<1x32x32xbf16>
    %11 = vector.shape_cast %10 : vector<1x32x32xbf16> to vector<32x32xbf16>
    %cst_12 = arith.constant dense<0.000000e+00> : vector<16x32xf32>
    %12 = tpu.matmul %3, %11, %cst_12 {dimension_numbers = #tpu.dot_dimension_numbers<[1], [0], [0], [1], [0, 0, 1, 1], [], []>} : vector<16x32xbf16>, vector<32x32xbf16>, vector<16x32xf32> -> vector<16x32xf32>
    %c1_13 = arith.constant 1 : index
    %c0_14 = arith.constant 0 : index
    %13 = vector.load %arg6[%c1_13, %c0_14] : memref<3x32xf32, #tpu.memory_space<vmem>>, vector<1x32xf32>
    %14 = vector.broadcast %13 : vector<1x32xf32> to vector<16x32xf32>
    %15 = arith.addf %12, %14 : vector<16x32xf32>
    %c2 = arith.constant 2 : index
    %c0_15 = arith.constant 0 : index
    %c0_16 = arith.constant 0 : index
    %16 = vector.load %arg5[%c2, %c0_15, %c0_16] : memref<3x32x32xbf16, #tpu.memory_space<vmem>>, vector<1x32x32xbf16>
    %17 = vector.shape_cast %16 : vector<1x32x32xbf16> to vector<32x32xbf16>
    %cst_17 = arith.constant dense<0.000000e+00> : vector<16x32xf32>
    %18 = tpu.matmul %3, %17, %cst_17 {dimension_numbers = #tpu.dot_dimension_numbers<[1], [0], [0], [1], [0, 0, 1, 1], [], []>} : vector<16x32xbf16>, vector<32x32xbf16>, vector<16x32xf32> -> vector<16x32xf32>
    %c2_18 = arith.constant 2 : index
    %c0_19 = arith.constant 0 : index
    %19 = vector.load %arg6[%c2_18, %c0_19] : memref<3x32xf32, #tpu.memory_space<vmem>>, vector<1x32xf32>
    %20 = vector.broadcast %19 : vector<1x32xf32> to vector<16x32xf32>
    %21 = arith.addf %18, %20 : vector<16x32xf32>
    %22 = vector.extract_strided_slice %9 {offsets = [0, 0], sizes = [16, 8], strides = [1, 1]} : vector<16x32xf32> to vector<16x8xf32>
    %23 = vector.extract_strided_slice %9 {offsets = [0, 8], sizes = [16, 8], strides = [1, 1]} : vector<16x32xf32> to vector<16x8xf32>
    %24 = vector.extract_strided_slice %9 {offsets = [0, 16], sizes = [16, 8], strides = [1, 1]} : vector<16x32xf32> to vector<16x8xf32>
    %25 = vector.extract_strided_slice %9 {offsets = [0, 24], sizes = [16, 8], strides = [1, 1]} : vector<16x32xf32> to vector<16x8xf32>
    %26 = vector.shape_cast %22 : vector<16x8xf32> to vector<1x16x8xf32>
    %27 = vector.shape_cast %23 : vector<16x8xf32> to vector<1x16x8xf32>
    %28 = vector.shape_cast %24 : vector<16x8xf32> to vector<1x16x8xf32>
    %29 = vector.shape_cast %25 : vector<16x8xf32> to vector<1x16x8xf32>
    %30 = tpu.concatenate %26, %27, %28, %29 in 0 : vector<1x16x8xf32>, vector<1x16x8xf32>, vector<1x16x8xf32>, vector<1x16x8xf32> -> vector<4x16x8xf32>
    %31 = arith.truncf %30 : vector<4x16x8xf32> to vector<4x16x8xbf16>
    %32 = vector.extract_strided_slice %15 {offsets = [0, 0], sizes = [16, 8], strides = [1, 1]} : vector<16x32xf32> to vector<16x8xf32>
    %33 = vector.extract_strided_slice %15 {offsets = [0, 8], sizes = [16, 8], strides = [1, 1]} : vector<16x32xf32> to vector<16x8xf32>
    %34 = vector.extract_strided_slice %15 {offsets = [0, 16], sizes = [16, 8], strides = [1, 1]} : vector<16x32xf32> to vector<16x8xf32>
    %35 = vector.extract_strided_slice %15 {offsets = [0, 24], sizes = [16, 8], strides = [1, 1]} : vector<16x32xf32> to vector<16x8xf32>
    %36 = vector.shape_cast %32 : vector<16x8xf32> to vector<1x16x8xf32>
    %37 = vector.shape_cast %33 : vector<16x8xf32> to vector<1x16x8xf32>
    %38 = vector.shape_cast %34 : vector<16x8xf32> to vector<1x16x8xf32>
    %39 = vector.shape_cast %35 : vector<16x8xf32> to vector<1x16x8xf32>
    %40 = tpu.concatenate %36, %37, %38, %39 in 0 : vector<1x16x8xf32>, vector<1x16x8xf32>, vector<1x16x8xf32>, vector<1x16x8xf32> -> vector<4x16x8xf32>
    %41 = arith.truncf %40 : vector<4x16x8xf32> to vector<4x16x8xbf16>
    %42 = vector.extract_strided_slice %21 {offsets = [0, 0], sizes = [16, 8], strides = [1, 1]} : vector<16x32xf32> to vector<16x8xf32>
    %43 = vector.extract_strided_slice %21 {offsets = [0, 8], sizes = [16, 8], strides = [1, 1]} : vector<16x32xf32> to vector<16x8xf32>
    %44 = vector.extract_strided_slice %21 {offsets = [0, 16], sizes = [16, 8], strides = [1, 1]} : vector<16x32xf32> to vector<16x8xf32>
    %45 = vector.extract_strided_slice %21 {offsets = [0, 24], sizes = [16, 8], strides = [1, 1]} : vector<16x32xf32> to vector<16x8xf32>
    %46 = vector.shape_cast %42 : vector<16x8xf32> to vector<1x16x8xf32>
    %47 = vector.shape_cast %43 : vector<16x8xf32> to vector<1x16x8xf32>
    %48 = vector.shape_cast %44 : vector<16x8xf32> to vector<1x16x8xf32>
    %49 = vector.shape_cast %45 : vector<16x8xf32> to vector<1x16x8xf32>
    %50 = tpu.concatenate %46, %47, %48, %49 in 0 : vector<1x16x8xf32>, vector<1x16x8xf32>, vector<1x16x8xf32>, vector<1x16x8xf32> -> vector<4x16x8xf32>
    %51 = arith.truncf %50 : vector<4x16x8xf32> to vector<4x16x8xbf16>
    %c0_20 = arith.constant 0 : index
    %c0_21 = arith.constant 0 : index
    %c0_22 = arith.constant 0 : index
    %52 = vector.load %arg4[%c0_20, %c0_21, %c0_22] : memref<1x16x4xi32, #tpu.memory_space<vmem>>, vector<1x16x4xi32>
    %53 = vector.shape_cast %52 : vector<1x16x4xi32> to vector<16x4xi32>
    %54 = tpu.iota {dimensions = array<i32: 1>} : vector<16x16xi32>
    %55 = vector.extract_strided_slice %53 {offsets = [0, 0], sizes = [16, 1], strides = [1, 1]} : vector<16x4xi32> to vector<16x1xi32>
    %56 = vector.broadcast %55 : vector<16x1xi32> to vector<16x16xi32>
    %57 = arith.cmpi eq, %54, %56 : vector<16x16xi32>
    %58 = vector.extract_strided_slice %53 {offsets = [0, 1], sizes = [16, 1], strides = [1, 1]} : vector<16x4xi32> to vector<16x1xi32>
    %59 = vector.broadcast %58 : vector<16x1xi32> to vector<16x16xi32>
    %60 = arith.cmpi eq, %54, %59 : vector<16x16xi32>
    %61 = arith.ori %57, %60 : vector<16x16xi1>
    %62 = vector.extract_strided_slice %53 {offsets = [0, 2], sizes = [16, 1], strides = [1, 1]} : vector<16x4xi32> to vector<16x1xi32>
    %63 = vector.broadcast %62 : vector<16x1xi32> to vector<16x16xi32>
    %64 = arith.cmpi eq, %54, %63 : vector<16x16xi32>
    %65 = arith.ori %61, %64 : vector<16x16xi1>
    %66 = vector.extract_strided_slice %53 {offsets = [0, 3], sizes = [16, 1], strides = [1, 1]} : vector<16x4xi32> to vector<16x1xi32>
    %67 = vector.broadcast %66 : vector<16x1xi32> to vector<16x16xi32>
    %68 = arith.cmpi eq, %54, %67 : vector<16x16xi32>
    %69 = arith.ori %65, %68 : vector<16x16xi1>
    %cst_23 = arith.constant 0.000000e+00 : f32
    %cst_24 = arith.constant -1.000000e+30 : f32
    %70 = vector.broadcast %cst_23 : f32 to vector<16x16xf32>
    %71 = vector.broadcast %cst_24 : f32 to vector<16x16xf32>
    %72 = arith.select %69, %70, %71 : vector<16x16xi1>, vector<16x16xf32>
    "tpu.trace_start"() <{level = 10 : i32, message = "hqd,hkd->hqk"}> : () -> ()
    %cst_25 = arith.constant dense<0.000000e+00> : vector<4x16x16xf32>
    %73 = tpu.matmul %31, %41, %cst_25 {dimension_numbers = #tpu.dot_dimension_numbers<[2], [2], [1], [1], [0, 0, 0, 1, 1, 1], [0], [0]>} : vector<4x16x8xbf16>, vector<4x16x8xbf16>, vector<4x16x16xf32> -> vector<4x16x16xf32>
    "tpu.trace_stop"() : () -> ()
    %74 = vector.shape_cast %72 : vector<16x16xf32> to vector<1x16x16xf32>
    %75 = vector.broadcast %74 : vector<1x16x16xf32> to vector<4x16x16xf32>
    %76 = arith.addf %73, %75 : vector<4x16x16xf32>
    %cst_26 = arith.constant dense<0xFF800000> : vector<4x16xf32>
    %77 = vector.multi_reduction <maximumf>, %76, %cst_26 [2] : vector<4x16x16xf32> to vector<4x16xf32>
    %78 = vector.shape_cast %77 : vector<4x16xf32> to vector<4x16x1xf32>
    %79 = vector.broadcast %78 : vector<4x16x1xf32> to vector<4x16x16xf32>
    %80 = arith.subf %76, %79 : vector<4x16x16xf32>
    %81 = math.exp %80 : vector<4x16x16xf32>
    %cst_27 = arith.constant dense<0.000000e+00> : vector<4x16xf32>
    %82 = vector.multi_reduction <add>, %81, %cst_27 [2] : vector<4x16x16xf32> to vector<4x16xf32>
    %83 = vector.shape_cast %82 : vector<4x16xf32> to vector<4x16x1xf32>
    %84 = tpu.reciprocal %83 {approx = true} : vector<4x16x1xf32> -> vector<4x16x1xf32>
    %85 = arith.mulf %83, %84 : vector<4x16x1xf32>
    %cst_28 = arith.constant 2.000000e+00 : f32
    %86 = vector.broadcast %cst_28 : f32 to vector<4x16x1xf32>
    %87 = arith.subf %86, %85 : vector<4x16x1xf32>
    %88 = arith.mulf %84, %87 : vector<4x16x1xf32>
    %89 = vector.broadcast %88 : vector<4x16x1xf32> to vector<4x16x16xf32>
    %90 = arith.mulf %81, %89 : vector<4x16x16xf32>
    %cst_29 = arith.constant dense<0.000000e+00> : vector<16x16xf32>
    %91 = vector.multi_reduction <add>, %90, %cst_29 [0] : vector<4x16x16xf32> to vector<16x16xf32>
    %cst_30 = arith.constant 2.500000e-01 : f32
    %92 = vector.broadcast %cst_30 : f32 to vector<16x16xf32>
    %93 = arith.mulf %91, %92 : vector<16x16xf32>
    %c0_31 = arith.constant 0 : index
    %c0_32 = arith.constant 0 : index
    %c0_33 = arith.constant 0 : index
    %94 = vector.load %arg11[%c0_31, %c0_32, %c0_33] : memref<1x16x16xf32, #tpu.memory_space<vmem>>, vector<1x16x16xf32>
    %95 = vector.shape_cast %94 : vector<1x16x16xf32> to vector<16x16xf32>
    %96 = vector.shape_cast %93 : vector<16x16xf32> to vector<1x16x16xf32>
    tpu.vector_store %arg11[%c0_31, %c0_32, %c0_33], %96 {strides = array<i32>} : memref<1x16x16xf32, #tpu.memory_space<vmem>>, vector<1x16x16xf32>,
    %97 = arith.truncf %90 : vector<4x16x16xf32> to vector<4x16x16xbf16>
    "tpu.trace_start"() <{level = 10 : i32, message = "hqk,hkd->hqd"}> : () -> ()
    %cst_34 = arith.constant dense<0.000000e+00> : vector<4x16x8xf32>
    %98 = tpu.matmul %97, %51, %cst_34 {dimension_numbers = #tpu.dot_dimension_numbers<[2], [1], [1], [2], [0, 0, 0, 1, 1, 2], [0], [0]>} : vector<4x16x16xbf16>, vector<4x16x8xbf16>, vector<4x16x8xf32> -> vector<4x16x8xf32>
    "tpu.trace_stop"() : () -> ()
    %99 = arith.truncf %98 : vector<4x16x8xf32> to vector<4x16x8xbf16>
    %c0_35 = arith.constant 0 : index
    %c0_36 = arith.constant 0 : index
    %c0_37 = arith.constant 0 : index
    %100 = vector.load %arg7[%c0_35, %c0_36, %c0_37] : memref<4x8x32xbf16, #tpu.memory_space<vmem>>, vector<4x8x32xbf16>
    "tpu.trace_start"() <{level = 10 : i32, message = "hqd,hde->hqe"}> : () -> ()
    %cst_38 = arith.constant dense<0.000000e+00> : vector<4x16x32xf32>
    %101 = tpu.matmul %99, %100, %cst_38 {dimension_numbers = #tpu.dot_dimension_numbers<[2], [1], [1], [2], [0, 0, 0, 1, 1, 2], [0], [0]>} : vector<4x16x8xbf16>, vector<4x8x32xbf16>, vector<4x16x32xf32> -> vector<4x16x32xf32>
    "tpu.trace_stop"() : () -> ()
    %cst_39 = arith.constant dense<0.000000e+00> : vector<16x32xf32>
    %102 = vector.multi_reduction <add>, %101, %cst_39 [0] : vector<4x16x32xf32> to vector<16x32xf32>
    %c0_40 = arith.constant 0 : index
    %c0_41 = arith.constant 0 : index
    %c0_42 = arith.constant 0 : index
    %103 = vector.load %arg8[%c0_40, %c0_41, %c0_42] : memref<2x32x32xbf16, #tpu.memory_space<vmem>>, vector<1x32x32xbf16>
    %104 = vector.shape_cast %103 : vector<1x32x32xbf16> to vector<32x32xbf16>
    %cst_43 = arith.constant dense<0.000000e+00> : vector<16x32xf32>
    %105 = tpu.matmul %1, %104, %cst_43 {dimension_numbers = #tpu.dot_dimension_numbers<[1], [0], [0], [1], [0, 0, 1, 1], [], []>} : vector<16x32xbf16>, vector<32x32xbf16>, vector<16x32xf32> -> vector<16x32xf32>
    %106 = arith.addf %105, %102 : vector<16x32xf32>
    %c0_44 = arith.constant 0 : index
    %c0_45 = arith.constant 0 : index
    %107 = vector.load %arg9[%c0_44, %c0_45] : memref<4x32xf32, #tpu.memory_space<vmem>>, vector<1x32xf32>
    %108 = vector.broadcast %107 : vector<1x32xf32> to vector<16x32xf32>
    %109 = arith.addf %106, %108 : vector<16x32xf32>
    %cst_46 = arith.constant dense<0.000000e+00> : vector<16xf32>
    %110 = vector.multi_reduction <add>, %109, %cst_46 [1] : vector<16x32xf32> to vector<16xf32>
    %111 = vector.shape_cast %110 : vector<16xf32> to vector<16x1xf32>
    %cst_47 = arith.constant 3.200000e+01 : f32
    %112 = vector.broadcast %cst_47 : f32 to vector<16x1xf32>
    %113 = arith.divf %111, %112 : vector<16x1xf32>
    %114 = vector.broadcast %113 : vector<16x1xf32> to vector<16x32xf32>
    %115 = arith.subf %109, %114 : vector<16x32xf32>
    %116 = vector.broadcast %113 : vector<16x1xf32> to vector<16x32xf32>
    %117 = arith.subf %109, %116 : vector<16x32xf32>
    %118 = arith.mulf %115, %117 : vector<16x32xf32>
    %cst_48 = arith.constant dense<0.000000e+00> : vector<16xf32>
    %119 = vector.multi_reduction <add>, %118, %cst_48 [1] : vector<16x32xf32> to vector<16xf32>
    %120 = vector.shape_cast %119 : vector<16xf32> to vector<16x1xf32>
    %cst_49 = arith.constant 3.200000e+01 : f32
    %121 = vector.broadcast %cst_49 : f32 to vector<16x1xf32>
    %122 = arith.divf %120, %121 : vector<16x1xf32>
    %123 = vector.broadcast %113 : vector<16x1xf32> to vector<16x32xf32>
    %124 = arith.subf %109, %123 : vector<16x32xf32>
    %cst_50 = arith.constant 9.99999974E-6 : f32
    %125 = vector.broadcast %cst_50 : f32 to vector<16x1xf32>
    %126 = arith.addf %122, %125 : vector<16x1xf32>
    %127 = math.rsqrt %126 : vector<16x1xf32>
    %128 = vector.broadcast %127 : vector<16x1xf32> to vector<16x32xf32>
    %129 = arith.mulf %124, %128 : vector<16x32xf32>
    %c1_51 = arith.constant 1 : index
    %c0_52 = arith.constant 0 : index
    %130 = vector.load %arg9[%c1_51, %c0_52] : memref<4x32xf32, #tpu.memory_space<vmem>>, vector<1x32xf32>
    %131 = vector.broadcast %130 : vector<1x32xf32> to vector<16x32xf32>
    %132 = arith.mulf %129, %131 : vector<16x32xf32>
    %c2_53 = arith.constant 2 : index
    %c0_54 = arith.constant 0 : index
    %133 = vector.load %arg9[%c2_53, %c0_54] : memref<4x32xf32, #tpu.memory_space<vmem>>, vector<1x32xf32>
    %134 = vector.broadcast %133 : vector<1x32xf32> to vector<16x32xf32>
    %135 = arith.addf %132, %134 : vector<16x32xf32>
    %cst_55 = arith.constant 0.000000e+00 : f32
    %136 = vector.broadcast %cst_55 : f32 to vector<16x32xf32>
    %137 = arith.maximumf %135, %136 : vector<16x32xf32>
    %138 = arith.truncf %137 : vector<16x32xf32> to vector<16x32xbf16>
    %c1_56 = arith.constant 1 : index
    %c0_57 = arith.constant 0 : index
    %c0_58 = arith.constant 0 : index
    %139 = vector.load %arg8[%c1_56, %c0_57, %c0_58] : memref<2x32x32xbf16, #tpu.memory_space<vmem>>, vector<1x32x32xbf16>
    %140 = vector.shape_cast %139 : vector<1x32x32xbf16> to vector<32x32xbf16>
    %cst_59 = arith.constant dense<0.000000e+00> : vector<16x32xf32>
    %141 = tpu.matmul %138, %140, %cst_59 {dimension_numbers = #tpu.dot_dimension_numbers<[1], [0], [0], [1], [0, 0, 1, 1], [], []>} : vector<16x32xbf16>, vector<32x32xbf16>, vector<16x32xf32> -> vector<16x32xf32>
    %c3 = arith.constant 3 : index
    %c0_60 = arith.constant 0 : index
    %142 = vector.load %arg9[%c3, %c0_60] : memref<4x32xf32, #tpu.memory_space<vmem>>, vector<1x32xf32>
    %143 = vector.broadcast %142 : vector<1x32xf32> to vector<16x32xf32>
    %144 = arith.addf %141, %143 : vector<16x32xf32>
    %c0_61 = arith.constant 0 : index
    %c0_62 = arith.constant 0 : index
    %c0_63 = arith.constant 0 : index
    %145 = vector.load %arg10[%c0_61, %c0_62, %c0_63] : memref<1x16x32xf32, #tpu.memory_space<vmem>>, vector<1x16x32xf32>
    %146 = vector.shape_cast %145 : vector<1x16x32xf32> to vector<16x32xf32>
    %147 = vector.shape_cast %144 : vector<16x32xf32> to vector<1x16x32xf32>
    tpu.vector_store %arg10[%c0_61, %c0_62, %c0_63], %147 {strides = array<i32>} : memref<1x16x32xf32, #tpu.memory_space<vmem>>, vector<1x16x32xf32>,
    return
  }
  func.func @transform_0(%arg0: i32, %arg1: i32) -> (i32, i32, i32) {
    %c0_i32 = arith.constant 0 : i32
    %c0_i32_0 = arith.constant 0 : i32
    return %arg0, %arg1, %c0_i32 : i32, i32, i32
  }
  func.func @transform_1(%arg0: i32, %arg1: i32) -> (i32, i32, i32) {
    %c0_i32 = arith.constant 0 : i32
    %c0_i32_0 = arith.constant 0 : i32
    %c0_i32_1 = arith.constant 0 : i32
    return %arg0, %c0_i32, %c0_i32_0 : i32, i32, i32
  }
  func.func @transform_2(%arg0: i32, %arg1: i32) -> (i32, i32, i32) {
    %c0_i32 = arith.constant 0 : i32
    %c0_i32_0 = arith.constant 0 : i32
    return %arg0, %arg1, %c0_i32 : i32, i32, i32
  }
  func.func @transform_3(%arg0: i32, %arg1: i32) -> (i32, i32, i32) {
    %c0_i32 = arith.constant 0 : i32
    %c0_i32_0 = arith.constant 0 : i32
    %c0_i32_1 = arith.constant 0 : i32
    %c0_i32_2 = arith.constant 0 : i32
    return %c0_i32, %c0_i32_0, %c0_i32_1 : i32, i32, i32
  }
  func.func @transform_4(%arg0: i32, %arg1: i32) -> (i32, i32) {
    %c0_i32 = arith.constant 0 : i32
    %c0_i32_0 = arith.constant 0 : i32
    %c0_i32_1 = arith.constant 0 : i32
    return %c0_i32, %c0_i32_0 : i32, i32
  }
  func.func @transform_5(%arg0: i32, %arg1: i32) -> (i32, i32, i32) {
    %c0_i32 = arith.constant 0 : i32
    %c0_i32_0 = arith.constant 0 : i32
    %c0_i32_1 = arith.constant 0 : i32
    %c0_i32_2 = arith.constant 0 : i32
    return %c0_i32, %c0_i32_0, %c0_i32_1 : i32, i32, i32
  }
  func.func @transform_6(%arg0: i32, %arg1: i32) -> (i32, i32, i32) {
    %c0_i32 = arith.constant 0 : i32
    %c0_i32_0 = arith.constant 0 : i32
    %c0_i32_1 = arith.constant 0 : i32
    %c0_i32_2 = arith.constant 0 : i32
    return %c0_i32, %c0_i32_0, %c0_i32_1 : i32, i32, i32
  }
  func.func @transform_7(%arg0: i32, %arg1: i32) -> (i32, i32) {
    %c0_i32 = arith.constant 0 : i32
    %c0_i32_0 = arith.constant 0 : i32
    %c0_i32_1 = arith.constant 0 : i32
    return %c0_i32, %c0_i32_0 : i32, i32
  }
  func.func @transform_8(%arg0: i32, %arg1: i32) -> (i32, i32, i32) {
    %c0_i32 = arith.constant 0 : i32
    %c0_i32_0 = arith.constant 0 : i32
    return %arg0, %arg1, %c0_i32 : i32, i32, i32
  }
  func.func @transform_9(%arg0: i32, %arg1: i32) -> (i32, i32, i32) {
    %c0_i32 = arith.constant 0 : i32
    %c0_i32_0 = arith.constant 0 : i32
    return %arg0, %arg1, %c0_i32 : i32, i32, i32
  }
}

</mosaic_0001>

<llo_original>
// kernel: tpu_custom_call.1
$region0: #{tpu_custom_call.1}
  #allocation0 [shape = 'u32[]', space=smem, size = 0x4, offset = 0x4, fixed_abs, tag = 'smem constant byte address 0x4 - core index']
  #allocation1 [shape = 'u32[72,128]{1,0:T(1,128)}', space=vmem, size = 0x9000, scoped, tag = 'internal scratch']
  %s0 = inlined_call_operand.hbm [shape: bf16[2,16,32], index: 0, kind: input, shape index: {}]
  %s1 = inlined_call_operand.hbm [shape: bf16[2,16,32], index: 1, kind: input, shape index: {}]
  %s2 = inlined_call_operand.vmem [shape: s32[2,16,4], index: 2, kind: input, shape index: {}]
  %s3 = inlined_call_operand.hbm [shape: bf16[3,32,32], index: 3, kind: input, shape index: {}]
  %s4 = inlined_call_operand.vmem [shape: f32[3,32], index: 4, kind: input, shape index: {}]
  %s5 = inlined_call_operand.hbm [shape: bf16[4,8,32], index: 5, kind: input, shape index: {}]
  %s6 = inlined_call_operand.vmem [shape: bf16[2,32,32], index: 6, kind: input, shape index: {}]
  %s7 = inlined_call_operand.vmem [shape: f32[4,32], index: 7, kind: input, shape index: {}]
  %s8 = inlined_call_operand.hbm [shape: f32[2,16,32], index: 8, kind: output, shape index: {0}]
  %s9 = inlined_call_operand.hbm [shape: f32[2,16,16], index: 9, kind: output, shape index: {1}]
  %10 = xla_tuple %s8, %s9
  %s11 = sld [smem:[#allocation0]]
  $region89: #{tpu_custom_call.1} parent=0
    _
  %s13 = ssub.s32 1, %s11
  %s14 = scalar_select 0, %s13, %s11
  $region1: #{tpu_custom_call.1} parent=0
    #allocation2 [shape = 'u8[8192]{0}', space=vmem, size = 0x2000, scoped, tag = 'input window, operand 0']
    #allocation3 [shape = 's32[2]{0}', space=sflag, size = 0x8, scoped, tag = 'scoped memory for tpu_custom_call.1']
    #allocation4 [shape = 's32[2]{0}', space=sflag, size = 0x8, scoped, tag = 'scoped memory for tpu_custom_call.1']
    #allocation5 [shape = 'u8[8192]{0}', space=vmem, size = 0x2000, scoped, tag = 'input window, operand 1']
    #allocation6 [shape = 's32[2]{0}', space=sflag, size = 0x8, scoped, tag = 'scoped memory for tpu_custom_call.1']
    #allocation7 [shape = 'u8[24576]{0}', space=vmem, size = 0x6000, scoped, tag = 'input window, operand 3, single buffered']
    #allocation8 [shape = 'u8[8192]{0}', space=vmem, size = 0x2000, scoped, tag = 'input window, operand 5, single buffered']
    #allocation9 [shape = 's32[1]{0}', space=sflag, size = 0x4, scoped, tag = 'scoped memory for tpu_custom_call.1']
    #allocation10 [shape = 'u8[16384]{0}', space=vmem, size = 0x4000, scoped, tag = 'output window, operand 0']
    #allocation11 [shape = 'u8[16384]{0}', space=vmem, size = 0x4000, scoped, tag = 'output window, operand 1']
    #allocation12 [shape = 's32[2]{0}', space=sflag, size = 0x8, scoped, tag = 'scoped memory for tpu_custom_call.1']
    %15 = vsyncpa [#allocation3], 0
    %s16 = scalar_lea.sflag [#allocation3], 1
    %17 = vsyncpa %s16, 0
    %18 = vsyncpa [#allocation6], 0
    %s19 = scalar_lea.sflag [#allocation6], 1
    %20 = vsyncpa %s19, 0
    %21 = vsyncpa [#allocation9], 0
    %22 = vsyncpa [#allocation4], 0
    %s23 = scalar_lea.sflag [#allocation4], 1
    %24 = vsyncpa %s23, 0
    %25 = vsyncpa [#allocation12], 0
    %s26 = scalar_lea.sflag [#allocation12], 1
    %27 = vsyncpa %s26, 0
    loop: start=0, step=1, limit=4
    $region2: #{tpu_custom_call.1} parent=1 // loop_pre_header
      _
    $region3: #{tpu_custom_call.1} parent=1 // loop_header
      %s29 = sphi 0, %s33
      %p30 = scmp.ge.s32.totalorder %s29, 4
      %s36 = sphi 0, %s48
      %s37 = sphi 0, %s44
      %s38 = sphi 0, %s36
      %s39 = sphi 0, %s37
      %s40 = sphi 0, %s38
      %s41 = sphi 0, %s39
      %s53 = sphi 0, %s55
      %s56 = sphi 0, %s53
      %s57 = sphi 0, %s56
      %s73 = sphi 0, %s57
      %s79 = sphi 0, %s81
      %s82 = sphi 0, %s79
      %s83 = sphi 0, %s82
      %s99 = sphi 0, %s83
      %s107 = sphi 0, %s109
      %s110 = sphi 0, %s107
      %s111 = sphi 0, %s110
      %s127 = sphi 0, %s111
      %s131 = sphi 0, %s131
      %s133 = sphi 0, %s131
      %s134 = sphi 0, %s133
      %s148 = sphi 0, %s134
      %s152 = sphi 0, %s152
      %s154 = sphi 0, %s152
      %s155 = sphi 0, %s154
      %s169 = sphi 0, %s155
      %s173 = sphi 0, %s173
      %s175 = sphi 0, %s173
      %s176 = sphi 0, %s175
      %s190 = sphi 0, %s176
      %s194 = sphi 0, %s194
      %s196 = sphi 0, %s194
      %s197 = sphi 0, %s196
      %s211 = sphi 0, %s197
      %s215 = sphi 0, %s215
      %s217 = sphi 0, %s215
      %s218 = sphi 0, %s217
      %s232 = sphi 0, %s218
      %s240 = sphi 0, %s242
      %s243 = sphi 0, %s240
      %s244 = sphi 0, %s243
      %s260 = sphi 0, %s244
      %s268 = sphi 0, %s270
      %s271 = sphi 0, %s268
      %s272 = sphi 0, %s271
      %s288 = sphi 0, %s272
    $region4: #{tpu_custom_call.1} parent=1 // loop_header_branch
      %32 = sbr.rel (%p30) target = $region8
    $region5: #{tpu_custom_call.1} parent=1 // loop_body
      %s34 = ssub.s32 %s29, 1
      %s35 = ssub.s32 %s29, 2
      %s42 = sadd.s32 1, %s37
      %p43 = scmp.ge.s32.totalorder %s42, 1
      %s44 = scalar_select %p43, 0, %s42
      %s45 = sadd.s32 1, %s36
      %s46 = scalar_select %p43, %s45, %s36
      %p47 = scmp.ge.s32.totalorder %s46, 2
      %s48 = scalar_select %p47, 0, %s46
      %s49 = ssub.s32 %s36, %s48
      %s50 = ssub.s32 %s37, %s44
      %s51 = sor.u32 %s49, %s50
      %p52 = scmp.eq.s32.totalorder %s51, 0
      %s54 = sadd.s32 %s53, 1
      %s55 = scalar_select %p52, %s53, %s54
      %p58 = pneg %p52
      %p59 = scmp.eq.s32.totalorder %s29, 1
      %p60 = por %p58, %p59
      %p61 = scmp.ne.s32.totalorder %s53, %s56
      %p62 = scmp.eq.s32.totalorder %s29, 0
      %p63 = por %p61, %p62
      %p64 = scmp.ne.s32.totalorder %s53, %s56
      %p65 = scmp.eq.s32.totalorder %s34, 1
      %p66 = por %p64, %p65
      %p67 = scmp.ne.s32.totalorder %s56, %s57
      %p68 = scmp.eq.s32.totalorder %s34, 0
      %p69 = por %p67, %p68
      %p70 = scmp.ne.s32.totalorder %s56, %s57
      %p71 = scmp.eq.s32.totalorder %s35, 1
      %p72 = por %p70, %p71
      %p74 = scmp.ne.s32.totalorder %s57, %s73
      %p75 = scmp.eq.s32.totalorder %s35, 0
      %p76 = por %p74, %p75
      %s77 = ssub.s32 %s36, %s48
      %p78 = scmp.eq.s32.totalorder %s77, 0
      %s80 = sadd.s32 %s79, 1
      %s81 = scalar_select %p78, %s79, %s80
      %p84 = pneg %p78
      %p85 = scmp.eq.s32.totalorder %s29, 1
      %p86 = por %p84, %p85
      %p87 = scmp.ne.s32.totalorder %s79, %s82
      %p88 = scmp.eq.s32.totalorder %s29, 0
      %p89 = por %p87, %p88
      %p90 = scmp.ne.s32.totalorder %s79, %s82
      %p91 = scmp.eq.s32.totalorder %s34, 1
      %p92 = por %p90, %p91
      %p93 = scmp.ne.s32.totalorder %s82, %s83
      %p94 = scmp.eq.s32.totalorder %s34, 0
      %p95 = por %p93, %p94
      %p96 = scmp.ne.s32.totalorder %s82, %s83
      %p97 = scmp.eq.s32.totalorder %s35, 1
      %p98 = por %p96, %p97
      %p100 = scmp.ne.s32.totalorder %s83, %s99
      %p101 = scmp.eq.s32.totalorder %s35, 0
      %p102 = por %p100, %p101
      %s103 = ssub.s32 %s36, %s48
      %s104 = ssub.s32 %s37, %s44
      %s105 = sor.u32 %s103, %s104
      %p106 = scmp.eq.s32.totalorder %s105, 0
      %s108 = sadd.s32 %s107, 1
      %s109 = scalar_select %p106, %s107, %s108
      %p112 = pneg %p106
      %p113 = scmp.eq.s32.totalorder %s29, 1
      %p114 = por %p112, %p113
      %p115 = scmp.ne.s32.totalorder %s107, %s110
      %p116 = scmp.eq.s32.totalorder %s29, 0
      %p117 = por %p115, %p116
      %p118 = scmp.ne.s32.totalorder %s107, %s110
      %p119 = scmp.eq.s32.totalorder %s34, 1
      %p120 = por %p118, %p119
      %p121 = scmp.ne.s32.totalorder %s110, %s111
      %p122 = scmp.eq.s32.totalorder %s34, 0
      %p123 = por %p121, %p122
      %p124 = scmp.ne.s32.totalorder %s110, %s111
      %p125 = scmp.eq.s32.totalorder %s35, 1
      %p126 = por %p124, %p125
      %p128 = scmp.ne.s32.totalorder %s111, %s127
      %p129 = scmp.eq.s32.totalorder %s35, 0
      %p130 = por %p128, %p129
      %s132 = sadd.s32 %s131, 1
      %p135 = scmp.eq.s32.totalorder %s29, 1
      %p136 = scmp.ne.s32.totalorder %s131, %s133
      %p137 = scmp.eq.s32.totalorder %s29, 0
      %p138 = por %p136, %p137
      %p139 = scmp.ne.s32.totalorder %s131, %s133
      %p140 = scmp.eq.s32.totalorder %s34, 1
      %p141 = por %p139, %p140
      %p142 = scmp.ne.s32.totalorder %s133, %s134
      %p143 = scmp.eq.s32.totalorder %s34, 0
      %p144 = por %p142, %p143
      %p145 = scmp.ne.s32.totalorder %s133, %s134
      %p146 = scmp.eq.s32.totalorder %s35, 1
      %p147 = por %p145, %p146
      %p149 = scmp.ne.s32.totalorder %s134, %s148
      %p150 = scmp.eq.s32.totalorder %s35, 0
      %p151 = por %p149, %p150
      %s153 = sadd.s32 %s152, 1
      %p156 = scmp.eq.s32.totalorder %s29, 1
      %p157 = scmp.ne.s32.totalorder %s152, %s154
      %p158 = scmp.eq.s32.totalorder %s29, 0
      %p159 = por %p157, %p158
      %p160 = scmp.ne.s32.totalorder %s152, %s154
      %p161 = scmp.eq.s32.totalorder %s34, 1
      %p162 = por %p160, %p161
      %p163 = scmp.ne.s32.totalorder %s154, %s155
      %p164 = scmp.eq.s32.totalorder %s34, 0
      %p165 = por %p163, %p164
      %p166 = scmp.ne.s32.totalorder %s154, %s155
      %p167 = scmp.eq.s32.totalorder %s35, 1
      %p168 = por %p166, %p167
      %p170 = scmp.ne.s32.totalorder %s155, %s169
      %p171 = scmp.eq.s32.totalorder %s35, 0
      %p172 = por %p170, %p171
      %s174 = sadd.s32 %s173, 1
      %p177 = scmp.eq.s32.totalorder %s29, 1
      %p178 = scmp.ne.s32.totalorder %s173, %s175
      %p179 = scmp.eq.s32.totalorder %s29, 0
      %p180 = por %p178, %p179
      %p181 = scmp.ne.s32.totalorder %s173, %s175
      %p182 = scmp.eq.s32.totalorder %s34, 1
      %p183 = por %p181, %p182
      %p184 = scmp.ne.s32.totalorder %s175, %s176
      %p185 = scmp.eq.s32.totalorder %s34, 0
      %p186 = por %p184, %p185
      %p187 = scmp.ne.s32.totalorder %s175, %s176
      %p188 = scmp.eq.s32.totalorder %s35, 1
      %p189 = por %p187, %p188
      %p191 = scmp.ne.s32.totalorder %s176, %s190
      %p192 = scmp.eq.s32.totalorder %s35, 0
      %p193 = por %p191, %p192
      %s195 = sadd.s32 %s194, 1
      %p198 = scmp.eq.s32.totalorder %s29, 1
      %p199 = scmp.ne.s32.totalorder %s194, %s196
      %p200 = scmp.eq.s32.totalorder %s29, 0
      %p201 = por %p199, %p200
      %p202 = scmp.ne.s32.totalorder %s194, %s196
      %p203 = scmp.eq.s32.totalorder %s34, 1
      %p204 = por %p202, %p203
      %p205 = scmp.ne.s32.totalorder %s196, %s197
      %p206 = scmp.eq.s32.totalorder %s34, 0
      %p207 = por %p205, %p206
      %p208 = scmp.ne.s32.totalorder %s196, %s197
      %p209 = scmp.eq.s32.totalorder %s35, 1
      %p210 = por %p208, %p209
      %p212 = scmp.ne.s32.totalorder %s197, %s211
      %p213 = scmp.eq.s32.totalorder %s35, 0
      %p214 = por %p212, %p213
      %s216 = sadd.s32 %s215, 1
      %p219 = scmp.eq.s32.totalorder %s29, 1
      %p220 = scmp.ne.s32.totalorder %s215, %s217
      %p221 = scmp.eq.s32.totalorder %s29, 0
      %p222 = por %p220, %p221
      %p223 = scmp.ne.s32.totalorder %s215, %s217
      %p224 = scmp.eq.s32.totalorder %s34, 1
      %p225 = por %p223, %p224
      %p226 = scmp.ne.s32.totalorder %s217, %s218
      %p227 = scmp.eq.s32.totalorder %s34, 0
      %p228 = por %p226, %p227
      %p229 = scmp.ne.s32.totalorder %s217, %s218
      %p230 = scmp.eq.s32.totalorder %s35, 1
      %p231 = por %p229, %p230
      %p233 = scmp.ne.s32.totalorder %s218, %s232
      %p234 = scmp.eq.s32.totalorder %s35, 0
      %p235 = por %p233, %p234
      %s236 = ssub.s32 %s36, %s48
      %s237 = ssub.s32 %s37, %s44
      %s238 = sor.u32 %s236, %s237
      %p239 = scmp.eq.s32.totalorder %s238, 0
      %s241 = sadd.s32 %s240, 1
      %s242 = scalar_select %p239, %s240, %s241
      %p245 = pneg %p239
      %p246 = scmp.eq.s32.totalorder %s29, 1
      %p247 = por %p245, %p246
      %p248 = scmp.ne.s32.totalorder %s240, %s243
      %p249 = scmp.eq.s32.totalorder %s29, 0
      %p250 = por %p248, %p249
      %p251 = scmp.ne.s32.totalorder %s240, %s243
      %p252 = scmp.eq.s32.totalorder %s34, 1
      %p253 = por %p251, %p252
      %p254 = scmp.ne.s32.totalorder %s243, %s244
      %p255 = scmp.eq.s32.totalorder %s34, 0
      %p256 = por %p254, %p255
      %p257 = scmp.ne.s32.totalorder %s243, %s244
      %p258 = scmp.eq.s32.totalorder %s35, 1
      %p259 = por %p257, %p258
      %p261 = scmp.ne.s32.totalorder %s244, %s260
      %p262 = scmp.eq.s32.totalorder %s35, 0
      %p263 = por %p261, %p262
      %s264 = ssub.s32 %s36, %s48
      %s265 = ssub.s32 %s37, %s44
      %s266 = sor.u32 %s264, %s265
      %p267 = scmp.eq.s32.totalorder %s266, 0
      %s269 = sadd.s32 %s268, 1
      %s270 = scalar_select %p267, %s268, %s269
      %p273 = pneg %p267
      %p274 = scmp.eq.s32.totalorder %s29, 1
      %p275 = por %p273, %p274
      %p276 = scmp.ne.s32.totalorder %s268, %s271
      %p277 = scmp.eq.s32.totalorder %s29, 0
      %p278 = por %p276, %p277
      %p279 = scmp.ne.s32.totalorder %s268, %s271
      %p280 = scmp.eq.s32.totalorder %s34, 1
      %p281 = por %p279, %p280
      %p282 = scmp.ne.s32.totalorder %s271, %s272
      %p283 = scmp.eq.s32.totalorder %s34, 0
      %p284 = por %p282, %p283
      %p285 = scmp.ne.s32.totalorder %s271, %s272
      %p286 = scmp.eq.s32.totalorder %s35, 1
      %p287 = por %p285, %p286
      %p289 = scmp.ne.s32.totalorder %s272, %s288
      %p290 = scmp.eq.s32.totalorder %s35, 0
      %p291 = por %p289, %p290
      %p292 = scmp.le.s32.totalorder 1, %s29
      %p293 = scmp.lt.s32.totalorder %s29, 3
      %p294 = pnand %p292, %p293
      %p295 = pneg %p294
      // Predicated region
      $region9: #{tpu_custom_call.1} parent=5 // pred_check
        _
      $region10: #{tpu_custom_call.1} parent=5 // pred_check_branch
        %297 = sbr.rel (%p294) target = $region12
      $region11: #{tpu_custom_call.1} parent=5 // pred_region
        %s298 = ssub.s32 %s29, 1
        // Predicated region
        $region13: #{tpu_custom_call.1} parent=11 // pred_check
          %p299 = pneg %p144
        $region14: #{tpu_custom_call.1} parent=11 // pred_check_branch
          %301 = sbr.rel (%p299) target = $region16
        $region15: #{tpu_custom_call.1} parent=11 // pred_region
          %303 = vsyncadd [#allocation6], 0
          %s304 = sshll.u32 %s3, 4
          %s305 = int_to_ptr.hbm [resolvable:$true] %s304
          %s306 = sshll.u32 [#allocation7], 4
          %s307 = int_to_ptr.vmem [resolvable:$true] %s306
          %312 = dma.hbm_to_vmem [thread:$0]  %s305, 768, %s307, [#allocation6], 64, 64, 4
        $region16: #{tpu_custom_call.1} parent=11 // pred_fallthru
          _
        // Predicated region
        $region17: #{tpu_custom_call.1} parent=11 // pred_check
          %p313 = pneg %p165
        $region18: #{tpu_custom_call.1} parent=11 // pred_check_branch
          %315 = sbr.rel (%p313) target = $region20
        $region19: #{tpu_custom_call.1} parent=11 // pred_region
          _
        $region20: #{tpu_custom_call.1} parent=11 // pred_fallthru
          _
        // Predicated region
        $region21: #{tpu_custom_call.1} parent=11 // pred_check
          %p316 = pneg %p186
        $region22: #{tpu_custom_call.1} parent=11 // pred_check_branch
          %318 = sbr.rel (%p316) target = $region24
        $region23: #{tpu_custom_call.1} parent=11 // pred_region
          %320 = vsyncadd [#allocation9], 0
          %s321 = sshll.u32 %s5, 4
          %s322 = int_to_ptr.hbm [resolvable:$true] %s321
          %s323 = sshll.u32 [#allocation8], 4
          %s324 = int_to_ptr.vmem [resolvable:$true] %s323
          %329 = dma.hbm_to_vmem [thread:$0]  %s322, 256, %s324, [#allocation9], 64, 64, 4
        $region24: #{tpu_custom_call.1} parent=11 // pred_fallthru
          _
        // Predicated region
        $region25: #{tpu_custom_call.1} parent=11 // pred_check
          %p330 = pneg %p207
        $region26: #{tpu_custom_call.1} parent=11 // pred_check_branch
          %332 = sbr.rel (%p330) target = $region28
        $region27: #{tpu_custom_call.1} parent=11 // pred_region
          _
        $region28: #{tpu_custom_call.1} parent=11 // pred_fallthru
          _
        // Predicated region
        $region29: #{tpu_custom_call.1} parent=11 // pred_check
          %p333 = pneg %p228
        $region30: #{tpu_custom_call.1} parent=11 // pred_check_branch
          %335 = sbr.rel (%p333) target = $region32
        $region31: #{tpu_custom_call.1} parent=11 // pred_region
          _
        $region32: #{tpu_custom_call.1} parent=11 // pred_fallthru
          _
      $region12: #{tpu_custom_call.1} parent=5 // pred_fallthru
        _
      %p336 = scmp.lt.s32.totalorder %s29, 2
      // Predicated region
      $region33: #{tpu_custom_call.1} parent=5 // pred_check
        %p337 = pneg %p336
      $region34: #{tpu_custom_call.1} parent=5 // pred_check_branch
        %339 = sbr.rel (%p337) target = $region36
      $region35: #{tpu_custom_call.1} parent=5 // pred_region
        // Predicated region
        $region37: #{tpu_custom_call.1} parent=35 // pred_check
          %p340 = pneg %p63
        $region38: #{tpu_custom_call.1} parent=35 // pred_check_branch
          %342 = sbr.rel (%p340) target = $region40
        $region39: #{tpu_custom_call.1} parent=35 // pred_region
          %s343 = sand.u32 %s53, 1
          %s344 = scalar_lea.sflag [#allocation3], %s343
          %s345 = sand.u32 %s53, 1
          %s346 = smul.addr %s345, 8
          %s347 = scalar_lea.vmem [#allocation2], %s346
          %s348 = smul.u32 2, %s37
          %350 = vsyncadd %s344, 0
          %s351 = smul.addr %s36, 2
          %s352 = sadd.s32 %s348, %s351
          %s353 = smul.addr %s352, 4
          %s354 = scalar_lea.hbm %s0, %s353
          %s355 = sshll.u32 %s354, 4
          %s356 = int_to_ptr.hbm [resolvable:$true] %s355
          %s357 = sshll.u32 %s347, 4
          %s358 = int_to_ptr.vmem [resolvable:$true] %s357
          %363 = dma.hbm_to_vmem [thread:$0]  %s356, 128, %s358, %s344, 64, 64, 4
        $region40: #{tpu_custom_call.1} parent=35 // pred_fallthru
          _
        // Predicated region
        $region41: #{tpu_custom_call.1} parent=35 // pred_check
          %p364 = pneg %p89
        $region42: #{tpu_custom_call.1} parent=35 // pred_check_branch
          %366 = sbr.rel (%p364) target = $region44
        $region43: #{tpu_custom_call.1} parent=35 // pred_region
          %s367 = sand.u32 %s29, 1
          %s368 = scalar_lea.sflag [#allocation6], %s367
          %s369 = sand.u32 %s79, 1
          %s370 = smul.addr %s369, 8
          %s371 = scalar_lea.vmem [#allocation5], %s370
          %373 = vsyncadd %s368, 0
          %s374 = smul.addr %s36, 2
          %s375 = smul.addr %s374, 4
          %s376 = scalar_lea.hbm %s1, %s375
          %s377 = sshll.u32 %s376, 4
          %s378 = int_to_ptr.hbm [resolvable:$true] %s377
          %s379 = sshll.u32 %s371, 4
          %s380 = int_to_ptr.vmem [resolvable:$true] %s379
          %385 = dma.hbm_to_vmem [thread:$0]  %s378, 128, %s380, %s368, 64, 64, 4
        $region44: #{tpu_custom_call.1} parent=35 // pred_fallthru
          _
        // Predicated region
        $region45: #{tpu_custom_call.1} parent=35 // pred_check
          %p386 = pneg %p117
        $region46: #{tpu_custom_call.1} parent=35 // pred_check_branch
          %388 = sbr.rel (%p386) target = $region48
        $region47: #{tpu_custom_call.1} parent=35 // pred_region
          %s389 = smul.u32 2, %s37
          %p390 = scmp.lt.s32.totalorder %s36, 1
          %s391 = scalar_select %p390, %s36, 1
          %p392 = scmp.lt.s32.totalorder %s389, 1
          %s393 = scalar_select %p392, %s389, 1
          %s394 = smul.addr %s391, 2
          %s395 = sadd.s32 %s393, %s394
          %s396 = smul.addr %s395, 8
          %s397 = scalar_lea.vmem %s2, %s396
          %s398 = smul.u32 2, %s37
        $region48: #{tpu_custom_call.1} parent=35 // pred_fallthru
          _
      $region36: #{tpu_custom_call.1} parent=5 // pred_fallthru
        _
      %p399 = scmp.le.s32.totalorder 1, %s29
      %p400 = scmp.lt.s32.totalorder %s29, 3
      %p401 = pnand %p399, %p400
      %p402 = pneg %p401
      // Predicated region
      $region49: #{tpu_custom_call.1} parent=5 // pred_check
        _
      $region50: #{tpu_custom_call.1} parent=5 // pred_check_branch
        %404 = sbr.rel (%p401) target = $region52
      $region51: #{tpu_custom_call.1} parent=5 // pred_region
        %s405 = ssub.s32 %s29, 1
        %s406 = sand.u32 %s56, 1
        %s407 = scalar_lea.sflag [#allocation3], %s406
        %s408 = sand.u32 %s56, 1
        %s409 = smul.addr %s408, 8
        %s410 = scalar_lea.vmem [#allocation2], %s409
        // Predicated region
        $region53: #{tpu_custom_call.1} parent=51 // pred_check
          %p411 = pneg %p69
        $region54: #{tpu_custom_call.1} parent=51 // pred_check_branch
          %413 = sbr.rel (%p411) target = $region56
        $region55: #{tpu_custom_call.1} parent=51 // pred_region
          %415 = dma.done %s407, 128
        $region56: #{tpu_custom_call.1} parent=51 // pred_fallthru
          _
        %s416 = sand.u32 %s34, 1
        %s417 = scalar_lea.sflag [#allocation6], %s416
        %s418 = sand.u32 %s82, 1
        %s419 = smul.addr %s418, 8
        %s420 = scalar_lea.vmem [#allocation5], %s419
        // Predicated region
        $region57: #{tpu_custom_call.1} parent=51 // pred_check
          %p421 = pneg %p95
        $region58: #{tpu_custom_call.1} parent=51 // pred_check_branch
          %423 = sbr.rel (%p421) target = $region60
        $region59: #{tpu_custom_call.1} parent=51 // pred_region
          %425 = dma.done %s417, 128
        $region60: #{tpu_custom_call.1} parent=51 // pred_fallthru
          _
        // Predicated region
        $region61: #{tpu_custom_call.1} parent=51 // pred_check
          %p426 = pneg %p144
        $region62: #{tpu_custom_call.1} parent=51 // pred_check_branch
          %428 = sbr.rel (%p426) target = $region64
        $region63: #{tpu_custom_call.1} parent=51 // pred_region
          %430 = dma.done [#allocation6], 768
        $region64: #{tpu_custom_call.1} parent=51 // pred_fallthru
          _
        // Predicated region
        $region65: #{tpu_custom_call.1} parent=51 // pred_check
          %p431 = pneg %p186
        $region66: #{tpu_custom_call.1} parent=51 // pred_check_branch
          %433 = sbr.rel (%p431) target = $region68
        $region67: #{tpu_custom_call.1} parent=51 // pred_region
          %435 = dma.done [#allocation9], 256
        $region68: #{tpu_custom_call.1} parent=51 // pred_fallthru
          _
        %s436 = sand.u32 %s56, 1
        %s437 = scalar_lea.sflag [#allocation3], %s436
        %s438 = sand.u32 %s56, 1
        %s439 = smul.addr %s438, 8
        %s440 = scalar_lea.vmem [#allocation2], %s439
        %p441 = pneg %p69
        %p442 = pneg %p66
        %s443 = sand.u32 %s34, 1
        %s444 = scalar_lea.sflag [#allocation6], %s443
        %s445 = sand.u32 %s82, 1
        %s446 = smul.addr %s445, 8
        %s447 = scalar_lea.vmem [#allocation5], %s446
        %p448 = pneg %p95
        %p449 = pneg %p92
        %s450 = smul.u32 2, %s39
        %p451 = scmp.lt.s32.totalorder %s38, 1
        %s452 = scalar_select %p451, %s38, 1
        %p453 = scmp.lt.s32.totalorder %s450, 1
        %s454 = scalar_select %p453, %s450, 1
        %s455 = smul.addr %s452, 2
        %s456 = sadd.s32 %s454, %s455
        %s457 = smul.addr %s456, 8
        %s458 = scalar_lea.vmem %s2, %s457
        %p459 = pneg %p123
        %p460 = pneg %p120
        %p461 = pneg %p144
        %p462 = pneg %p141
        %p463 = pneg %p165
        %p464 = pneg %p162
        %p465 = pneg %p186
        %p466 = pneg %p183
        %p467 = pneg %p207
        %p468 = pneg %p204
        %p469 = pneg %p228
        %p470 = pneg %p225
        %p471 = pneg %p256
        %p472 = pneg %p253
        %s473 = sand.u32 %s243, 1
        %s474 = scalar_lea.sflag [#allocation4], %s473
        %s475 = sand.u32 %s243, 1
        %s476 = smul.addr %s475, 16
        %s477 = scalar_lea.vmem [#allocation10], %s476
        %p478 = pneg %p284
        %p479 = pneg %p281
        %s480 = sand.u32 %s271, 1
        %s481 = scalar_lea.sflag [#allocation12], %s480
        %s482 = sand.u32 %s271, 1
        %s483 = smul.addr %s482, 16
        %s484 = scalar_lea.vmem [#allocation11], %s483
        %s485 = smul.u32 2, %s39
        %s486 = smul.u32 2, %s39
        %p487 = scmp.lt.s32.totalorder %s38, 1
        %s488 = scalar_select %p487, %s38, 1
        %p489 = scmp.lt.s32.totalorder %s486, 1
        %s490 = scalar_select %p489, %s486, 1
        %s491 = smul.addr %s488, 2
        %s492 = sadd.s32 %s490, %s491
        %s493 = smul.addr %s492, 8
        %s494 = scalar_lea.vmem %s2, %s493
        %s495 = smul.u32 2, %s39
        %s496 = smul.u32 2, %s39
        %s497 = smul.u32 2, %s39
        %v499 = vld [vmem:[%s410] sm:$0xf]
        %v500 = vld [vmem:[%s410 + $0x4] sm:$0xf]
        %v501 = vld [vmem:[%s420] sm:$0xf]
        %v502 = vld [vmem:[%s420 + $0x4] sm:$0xf]
        %v503 = vld [vmem:[#allocation7] sm:$0xf]
        %v504 = vld [vmem:[#allocation7 + $0x4] sm:$0xf]
        %v505 = vld [vmem:[#allocation7 + $0x8] sm:$0xf]
        %v506 = vld [vmem:[#allocation7 + $0xc] sm:$0xf]
        %v507 = vld [vmem:[%s4] sm:$0x1]
        %v508 = vperm.slane %v507, 0
        %v511 = vunpack.c.l.b16 %v499
        %v512 = vunpack.c.l.b16 %v500
        %v513 = vpack.c.b16 %v512, %v511
        %v518 = vunpack.c.l.b16 %v503
        %v519 = vunpack.c.l.b16 %v504
        %v520 = vunpack.c.l.b16 %v505
        %v521 = vunpack.c.l.b16 %v506
        %v522 = vpack.c.b16 %v519, %v518
        %v523 = vpack.c.b16 %v521, %v520
        %vm526 = vcmask 261120
        %v528 = vsel %vm526, %v513, 0
        %530 = vmatpush.bf16.msra.mxu0 0
        %531 = vmatpush.bf16.msra.mxu0 0
        %532 = vmatpush.bf16.msra.mxu0 0
        %533 = vmatpush.bf16.msra.mxu0 0
        %534 = vmatpush.bf16.msra.mxu0 0
        %535 = vmatpush.bf16.msra.mxu0 0
        %536 = vmatpush.bf16.msra.mxu0 %v523
        %537 = vmatpush.bf16.msra.mxu0 %v522
        %538 = vmatmul.bf16.gmra.mxu0 %v528
        %v539 = vpop.f32.mrf.mxu0
        %v540 = vadd.f32 %v508, %v539
        %v541 = vpop.f32.mrf.mxu0
        %v542 = vadd.f32 %v508, %v541
        %543 = vdwg.mxu0
        %s544 = scalar_lea.vmem [#allocation7], 16
        %v545 = vld [vmem:[%s544] sm:$0xf]
        %v546 = vld [vmem:[%s544 + $0x4] sm:$0xf]
        %v547 = vld [vmem:[%s544 + $0x8] sm:$0xf]
        %v548 = vld [vmem:[%s544 + $0xc] sm:$0xf]
        %v549 = vld [vmem:[%s4 + $0x1] sm:$0x1]
        %v550 = vperm.slane %v549, 0
        %v553 = vunpack.c.l.b16 %v501
        %v554 = vunpack.c.l.b16 %v502
        %v555 = vpack.c.b16 %v554, %v553
        %v560 = vunpack.c.l.b16 %v545
        %v561 = vunpack.c.l.b16 %v546
        %v562 = vunpack.c.l.b16 %v547
        %v563 = vunpack.c.l.b16 %v548
        %v564 = vpack.c.b16 %v561, %v560
        %v565 = vpack.c.b16 %v563, %v562
        %v569 = vsel %vm526, %v555, 0
        %571 = vmatpush.bf16.msra.mxu0 0
        %572 = vmatpush.bf16.msra.mxu0 0
        %573 = vmatpush.bf16.msra.mxu0 0
        %574 = vmatpush.bf16.msra.mxu0 0
        %575 = vmatpush.bf16.msra.mxu0 0
        %576 = vmatpush.bf16.msra.mxu0 0
        %577 = vmatpush.bf16.msra.mxu0 %v565
        %578 = vmatpush.bf16.msra.mxu0 %v564
        %579 = vmatmul.bf16.gmra.mxu0 %v569
        %v580 = vpop.f32.mrf.mxu0
        %v581 = vadd.f32 %v550, %v580
        %v582 = vpop.f32.mrf.mxu0
        %v583 = vadd.f32 %v550, %v582
        %584 = vdwg.mxu0
        %s585 = scalar_lea.vmem [#allocation7], 32
        %v586 = vld [vmem:[%s585] sm:$0xf]
        %v587 = vld [vmem:[%s585 + $0x4] sm:$0xf]
        %v588 = vld [vmem:[%s585 + $0x8] sm:$0xf]
        %v589 = vld [vmem:[%s585 + $0xc] sm:$0xf]
        %v590 = vld [vmem:[%s4 + $0x2] sm:$0x1]
        %v591 = vperm.slane %v590, 0
        %v596 = vunpack.c.l.b16 %v586
        %v597 = vunpack.c.l.b16 %v587
        %v598 = vunpack.c.l.b16 %v588
        %v599 = vunpack.c.l.b16 %v589
        %v600 = vpack.c.b16 %v597, %v596
        %v601 = vpack.c.b16 %v599, %v598
        %604 = vmatpush.bf16.msra.mxu0 0
        %605 = vmatpush.bf16.msra.mxu0 0
        %606 = vmatpush.bf16.msra.mxu0 0
        %607 = vmatpush.bf16.msra.mxu0 0
        %608 = vmatpush.bf16.msra.mxu0 0
        %609 = vmatpush.bf16.msra.mxu0 0
        %610 = vmatpush.bf16.msra.mxu0 %v601
        %611 = vmatpush.bf16.msra.mxu0 %v600
        %612 = vmatmul.bf16.gmra.mxu0 %v569
        %v613 = vpop.f32.mrf.mxu0
        %v614 = vadd.f32 %v591, %v613
        %v615 = vpop.f32.mrf.mxu0
        %v616 = vadd.f32 %v591, %v615
        %617 = vdwg.mxu0
        %620 = vrot.lane.b32.xlu0 %v540, 120
        %v621 = vpop.permute.xlu0 %620
        %622 = vrot.lane.b32.xlu0 %v542, 120
        %v623 = vpop.permute.xlu0 %622
        %626 = vrot.lane.b32.xlu0 %v540, 112
        %v627 = vpop.permute.xlu0 %626
        %628 = vrot.lane.b32.xlu0 %v542, 112
        %v629 = vpop.permute.xlu0 %628
        %632 = vrot.lane.b32.xlu0 %v540, 104
        %v633 = vpop.permute.xlu0 %632
        %634 = vrot.lane.b32.xlu0 %v542, 104
        %v635 = vpop.permute.xlu0 %634
        %v638 = vpack.c.bf16 %v540, %v540
        %v639 = vpack.c.bf16 %v542, %v542
        %v640 = vpack.c.bf16 %v621, %v621
        %v641 = vpack.c.bf16 %v623, %v623
        %v642 = vpack.c.bf16 %v627, %v627
        %v643 = vpack.c.bf16 %v629, %v629
        %v644 = vpack.c.bf16 %v633, %v633
        %v645 = vpack.c.bf16 %v635, %v635
        %648 = vrot.lane.b32.xlu0 %v581, 120
        %v649 = vpop.permute.xlu0 %648
        %650 = vrot.lane.b32.xlu0 %v583, 120
        %v651 = vpop.permute.xlu0 %650
        %654 = vrot.lane.b32.xlu0 %v581, 112
        %v655 = vpop.permute.xlu0 %654
        %656 = vrot.lane.b32.xlu0 %v583, 112
        %v657 = vpop.permute.xlu0 %656
        %660 = vrot.lane.b32.xlu0 %v581, 104
        %v661 = vpop.permute.xlu0 %660
        %662 = vrot.lane.b32.xlu0 %v583, 104
        %v663 = vpop.permute.xlu0 %662
        %v666 = vpack.c.bf16 %v581, %v581
        %v667 = vpack.c.bf16 %v583, %v583
        %v668 = vpack.c.bf16 %v649, %v649
        %v669 = vpack.c.bf16 %v651, %v651
        %v670 = vpack.c.bf16 %v655, %v655
        %v671 = vpack.c.bf16 %v657, %v657
        %v672 = vpack.c.bf16 %v661, %v661
        %v673 = vpack.c.bf16 %v663, %v663
        %676 = vrot.lane.b32.xlu0 %v614, 120
        %v677 = vpop.permute.xlu0 %676
        %678 = vrot.lane.b32.xlu0 %v616, 120
        %v679 = vpop.permute.xlu0 %678
        %682 = vrot.lane.b32.xlu0 %v614, 112
        %v683 = vpop.permute.xlu0 %682
        %684 = vrot.lane.b32.xlu0 %v616, 112
        %v685 = vpop.permute.xlu0 %684
        %688 = vrot.lane.b32.xlu0 %v614, 104
        %v689 = vpop.permute.xlu0 %688
        %690 = vrot.lane.b32.xlu0 %v616, 104
        %v691 = vpop.permute.xlu0 %690
        %v694 = vpack.c.bf16 %v614, %v614
        %v695 = vpack.c.bf16 %v616, %v616
        %v696 = vpack.c.bf16 %v677, %v677
        %v697 = vpack.c.bf16 %v679, %v679
        %v698 = vpack.c.bf16 %v683, %v683
        %v699 = vpack.c.bf16 %v685, %v685
        %v700 = vpack.c.bf16 %v689, %v689
        %v701 = vpack.c.bf16 %v691, %v691
        %v702 = vld [vmem:[%s494] sm:$0xff]
        %v703 = vld [vmem:[%s494 + $0x8] sm:$0xff]
        %v704 = vlaneseq
        %v705 = vand.u32 %v704, 127
        %706 = vset.pattern.permute.xlu0 0
        %707 = vperm.xlu0 %706, %v702
        %v708 = vpop.permute.xlu0 %707
        %709 = vset.pattern.permute.xlu0 0
        %710 = vperm.xlu0 %709, %v703
        %v711 = vpop.permute.xlu0 %710
        %vm712 = vcmp.eq.s32.totalorder %v705, %v708
        %vm713 = vcmp.eq.s32.totalorder %v705, %v711
        %714 = vset.pattern.permute.xlu0 1
        %715 = vperm.xlu0 %714, %v702
        %v716 = vpop.permute.xlu0 %715
        %717 = vset.pattern.permute.xlu0 1
        %718 = vperm.xlu0 %717, %v703
        %v719 = vpop.permute.xlu0 %718
        %vm720 = vcmp.eq.s32.totalorder %v705, %v716
        %vm721 = vcmp.eq.s32.totalorder %v705, %v719
        %vm722 = vmor %vm712, %vm720
        %vm723 = vmor %vm713, %vm721
        %724 = vset.pattern.permute.xlu0 2
        %725 = vperm.xlu0 %724, %v702
        %v726 = vpop.permute.xlu0 %725
        %727 = vset.pattern.permute.xlu0 2
        %728 = vperm.xlu0 %727, %v703
        %v729 = vpop.permute.xlu0 %728
        %vm730 = vcmp.eq.s32.totalorder %v705, %v726
        %vm731 = vcmp.eq.s32.totalorder %v705, %v729
        %vm732 = vmor %vm722, %vm730
        %vm733 = vmor %vm723, %vm731
        %734 = vset.pattern.permute.xlu0 3
        %735 = vperm.xlu0 %734, %v702
        %v736 = vpop.permute.xlu0 %735
        %737 = vset.pattern.permute.xlu0 3
        %738 = vperm.xlu0 %737, %v703
        %v739 = vpop.permute.xlu0 %738
        %vm740 = vcmp.eq.s32.totalorder %v705, %v736
        %vm741 = vcmp.eq.s32.totalorder %v705, %v739
        %vm742 = vmor %vm732, %vm740
        %vm743 = vmor %vm733, %vm741
        %v744 = vsel %vm742, 0.0, -1e+30
        %v745 = vsel %vm743, 0.0, -1e+30
        %v748 = vunpack.c.l.b16 %v638
        %v749 = vunpack.c.l.b16 %v639
        %v750 = vpack.c.b16 %v749, %v748
        %v753 = vunpack.c.l.b16 %v666
        %v754 = vunpack.c.l.b16 %v667
        %v755 = vpack.c.b16 %v754, %v753
        %vm756 = vcmask 64512
        %v758 = vsel %vm756, %v750, 0
        %v761 = vsel %vm756, %v755, 0
        %763 = vmatpush.bf16.xpose.msra.mxu0 0
        %764 = vmatpush.bf16.xpose.msra.mxu0 0
        %765 = vmatpush.bf16.xpose.msra.mxu0 0
        %766 = vmatpush.bf16.xpose.msra.mxu0 0
        %767 = vmatpush.bf16.xpose.msra.mxu0 0
        %768 = vmatpush.bf16.xpose.msra.mxu0 0
        %769 = vmatpush.bf16.xpose.msra.mxu0 0
        %770 = vmatpush.bf16.xpose.msra.mxu0 %v761
        %771 = vmatmul.bf16.gmra.mxu0 %v758
        %v772 = vpop.f32.mrf.mxu0
        %v773 = vadd.f32 %v744, %v772
        %v774 = vpop.f32.mrf.mxu0
        %v775 = vadd.f32 %v745, %v774
        %776 = vdwg.mxu0
        %v779 = vunpack.c.l.b16 %v640
        %v780 = vunpack.c.l.b16 %v641
        %v781 = vpack.c.b16 %v780, %v779
        %v784 = vunpack.c.l.b16 %v668
        %v785 = vunpack.c.l.b16 %v669
        %v786 = vpack.c.b16 %v785, %v784
        %v788 = vsel %vm756, %v781, 0
        %v791 = vsel %vm756, %v786, 0
        %793 = vmatpush.bf16.xpose.msra.mxu0 0
        %794 = vmatpush.bf16.xpose.msra.mxu0 0
        %795 = vmatpush.bf16.xpose.msra.mxu0 0
        %796 = vmatpush.bf16.xpose.msra.mxu0 0
        %797 = vmatpush.bf16.xpose.msra.mxu0 0
        %798 = vmatpush.bf16.xpose.msra.mxu0 0
        %799 = vmatpush.bf16.xpose.msra.mxu0 0
        %800 = vmatpush.bf16.xpose.msra.mxu0 %v791
        %801 = vmatmul.bf16.gmra.mxu0 %v788
        %v802 = vpop.f32.mrf.mxu0
        %v803 = vadd.f32 %v744, %v802
        %v804 = vpop.f32.mrf.mxu0
        %v805 = vadd.f32 %v745, %v804
        %806 = vdwg.mxu0
        %v809 = vunpack.c.l.b16 %v642
        %v810 = vunpack.c.l.b16 %v643
        %v811 = vpack.c.b16 %v810, %v809
        %v814 = vunpack.c.l.b16 %v670
        %v815 = vunpack.c.l.b16 %v671
        %v816 = vpack.c.b16 %v815, %v814
        %v818 = vsel %vm756, %v811, 0
        %v821 = vsel %vm756, %v816, 0
        %823 = vmatpush.bf16.xpose.msra.mxu0 0
        %824 = vmatpush.bf16.xpose.msra.mxu0 0
        %825 = vmatpush.bf16.xpose.msra.mxu0 0
        %826 = vmatpush.bf16.xpose.msra.mxu0 0
        %827 = vmatpush.bf16.xpose.msra.mxu0 0
        %828 = vmatpush.bf16.xpose.msra.mxu0 0
        %829 = vmatpush.bf16.xpose.msra.mxu0 0
        %830 = vmatpush.bf16.xpose.msra.mxu0 %v821
        %831 = vmatmul.bf16.gmra.mxu0 %v818
        %v832 = vpop.f32.mrf.mxu0
        %v833 = vadd.f32 %v744, %v832
        %v834 = vpop.f32.mrf.mxu0
        %v835 = vadd.f32 %v745, %v834
        %836 = vdwg.mxu0
        %v839 = vunpack.c.l.b16 %v644
        %v840 = vunpack.c.l.b16 %v645
        %v841 = vpack.c.b16 %v840, %v839
        %v844 = vunpack.c.l.b16 %v672
        %v845 = vunpack.c.l.b16 %v673
        %v846 = vpack.c.b16 %v845, %v844
        %v848 = vsel %vm756, %v841, 0
        %v851 = vsel %vm756, %v846, 0
        %853 = vmatpush.bf16.xpose.msra.mxu0 0
        %854 = vmatpush.bf16.xpose.msra.mxu0 0
        %855 = vmatpush.bf16.xpose.msra.mxu0 0
        %856 = vmatpush.bf16.xpose.msra.mxu0 0
        %857 = vmatpush.bf16.xpose.msra.mxu0 0
        %858 = vmatpush.bf16.xpose.msra.mxu0 0
        %859 = vmatpush.bf16.xpose.msra.mxu0 0
        %860 = vmatpush.bf16.xpose.msra.mxu0 %v851
        %861 = vmatmul.bf16.gmra.mxu0 %v848
        %v862 = vpop.f32.mrf.mxu0
        %v863 = vadd.f32 %v744, %v862
        %v864 = vpop.f32.mrf.mxu0
        %v865 = vadd.f32 %v745, %v864
        %866 = vdwg.mxu0
        %vm867 = vcmask 130048
        %v868 = vsel %vm867, %v773, -inf
        %869 = vmax.xlane.f32.xlu0 %v868
        %v870 = vpop.xlane.xlu0 %869
        %v871 = vsel %vm867, %v775, -inf
        %872 = vmax.xlane.f32.xlu0 %v871
        %v873 = vpop.xlane.xlu0 %872
        %v874 = vsel %vm867, %v803, -inf
        %875 = vmax.xlane.f32.xlu0 %v874
        %v876 = vpop.xlane.xlu0 %875
        %v877 = vsel %vm867, %v805, -inf
        %878 = vmax.xlane.f32.xlu0 %v877
        %v879 = vpop.xlane.xlu0 %878
        %v880 = vsel %vm867, %v833, -inf
        %881 = vmax.xlane.f32.xlu0 %v880
        %v882 = vpop.xlane.xlu0 %881
        %v883 = vsel %vm867, %v835, -inf
        %884 = vmax.xlane.f32.xlu0 %v883
        %v885 = vpop.xlane.xlu0 %884
        %v886 = vsel %vm867, %v863, -inf
        %887 = vmax.xlane.f32.xlu0 %v886
        %v888 = vpop.xlane.xlu0 %887
        %v889 = vsel %vm867, %v865, -inf
        %890 = vmax.xlane.f32.xlu0 %v889
        %v891 = vpop.xlane.xlu0 %890
        %v892 = vsub.f32 %v773, %v870
        %v893 = vsub.f32 %v775, %v873
        %v894 = vsub.f32 %v803, %v876
        %v895 = vsub.f32 %v805, %v879
        %v896 = vsub.f32 %v833, %v882
        %v897 = vsub.f32 %v835, %v885
        %v898 = vsub.f32 %v863, %v888
        %v899 = vsub.f32 %v865, %v891
        %v900 = vmul.f32 %v892, 1.442695
        %v901 = vpow.pop %v900
        %v902 = vmul.f32 %v893, 1.442695
        %v903 = vpow.pop %v902
        %v904 = vmul.f32 %v894, 1.442695
        %v905 = vpow.pop %v904
        %v906 = vmul.f32 %v895, 1.442695
        %v907 = vpow.pop %v906
        %v908 = vmul.f32 %v896, 1.442695
        %v909 = vpow.pop %v908
        %v910 = vmul.f32 %v897, 1.442695
        %v911 = vpow.pop %v910
        %v912 = vmul.f32 %v898, 1.442695
        %v913 = vpow.pop %v912
        %v914 = vmul.f32 %v899, 1.442695
        %v915 = vpow.pop %v914
        %v916 = vsel %vm867, %v901, 0.0
        %917 = vadd.xlane.f32.xlu0 %v916
        %v918 = vpop.xlane.xlu0 %917
        %v919 = vsel %vm867, %v903, 0.0
        %920 = vadd.xlane.f32.xlu0 %v919
        %v921 = vpop.xlane.xlu0 %920
        %v922 = vsel %vm867, %v905, 0.0
        %923 = vadd.xlane.f32.xlu0 %v922
        %v924 = vpop.xlane.xlu0 %923
        %v925 = vsel %vm867, %v907, 0.0
        %926 = vadd.xlane.f32.xlu0 %v925
        %v927 = vpop.xlane.xlu0 %926
        %v928 = vsel %vm867, %v909, 0.0
        %929 = vadd.xlane.f32.xlu0 %v928
        %v930 = vpop.xlane.xlu0 %929
        %v931 = vsel %vm867, %v911, 0.0
        %932 = vadd.xlane.f32.xlu0 %v931
        %v933 = vpop.xlane.xlu0 %932
        %v934 = vsel %vm867, %v913, 0.0
        %935 = vadd.xlane.f32.xlu0 %v934
        %v936 = vpop.xlane.xlu0 %935
        %v937 = vsel %vm867, %v915, 0.0
        %938 = vadd.xlane.f32.xlu0 %v937
        %v939 = vpop.xlane.xlu0 %938
        %v940 = vrcp.pop %v918
        %v941 = vrcp.pop %v921
        %v942 = vrcp.pop %v924
        %v943 = vrcp.pop %v927
        %v944 = vrcp.pop %v930
        %v945 = vrcp.pop %v933
        %v946 = vrcp.pop %v936
        %v947 = vrcp.pop %v939
        %v948 = vmul.f32 %v918, %v940
        %v949 = vmul.f32 %v921, %v941
        %v950 = vmul.f32 %v924, %v942
        %v951 = vmul.f32 %v927, %v943
        %v952 = vmul.f32 %v930, %v944
        %v953 = vmul.f32 %v933, %v945
        %v954 = vmul.f32 %v936, %v946
        %v955 = vmul.f32 %v939, %v947
        %v956 = vsub.f32 2.0, %v948
        %v957 = vsub.f32 2.0, %v949
        %v958 = vsub.f32 2.0, %v950
        %v959 = vsub.f32 2.0, %v951
        %v960 = vsub.f32 2.0, %v952
        %v961 = vsub.f32 2.0, %v953
        %v962 = vsub.f32 2.0, %v954
        %v963 = vsub.f32 2.0, %v955
        %v964 = vmul.f32 %v940, %v956
        %v965 = vmul.f32 %v941, %v957
        %v966 = vmul.f32 %v942, %v958
        %v967 = vmul.f32 %v943, %v959
        %v968 = vmul.f32 %v944, %v960
        %v969 = vmul.f32 %v945, %v961
        %v970 = vmul.f32 %v946, %v962
        %v971 = vmul.f32 %v947, %v963
        %v972 = vmul.f32 %v901, %v964
        %v973 = vmul.f32 %v903, %v965
        %v974 = vmul.f32 %v905, %v966
        %v975 = vmul.f32 %v907, %v967
        %v976 = vmul.f32 %v909, %v968
        %v977 = vmul.f32 %v911, %v969
        %v978 = vmul.f32 %v913, %v970
        %v979 = vmul.f32 %v915, %v971
        %v980 = vsel %vm867, %v972, 0.0
        %v981 = vsel %vm867, %v974, 0.0
        %v982 = vadd.f32 %v980, %v981
        %v983 = vsel %vm867, %v976, 0.0
        %v984 = vadd.f32 %v982, %v983
        %v985 = vsel %vm867, %v978, 0.0
        %v986 = vadd.f32 %v984, %v985
        %v987 = vsel %vm867, %v973, 0.0
        %v988 = vsel %vm867, %v975, 0.0
        %v989 = vadd.f32 %v987, %v988
        %v990 = vsel %vm867, %v977, 0.0
        %v991 = vadd.f32 %v989, %v990
        %v992 = vsel %vm867, %v979, 0.0
        %v993 = vadd.f32 %v991, %v992
        %v994 = vmul.f32 %v986, 0.25
        %v995 = vmul.f32 %v993, 0.25
        %996 = vst.msk [vmem:[%s484] sm:$0xff] %vm867, %v994
        %997 = vst.msk [vmem:[%s484 + $0x8] sm:$0xff] %vm867, %v995
        %v998 = vpack.c.bf16 %v972, %v972
        %v999 = vpack.c.bf16 %v973, %v973
        %v1000 = vpack.c.bf16 %v974, %v974
        %v1001 = vpack.c.bf16 %v975, %v975
        %v1002 = vpack.c.bf16 %v976, %v976
        %v1003 = vpack.c.bf16 %v977, %v977
        %v1004 = vpack.c.bf16 %v978, %v978
        %v1005 = vpack.c.bf16 %v979, %v979
        %v1008 = vunpack.c.l.b16 %v998
        %v1009 = vunpack.c.l.b16 %v999
        %v1010 = vpack.c.b16 %v1009, %v1008
        %v1013 = vunpack.c.l.b16 %v694
        %v1014 = vunpack.c.l.b16 %v695
        %v1015 = vpack.c.b16 %v1014, %v1013
        %v1018 = vsel %vm867, %v1010, 0
        %1020 = vmatpush.bf16.msra.mxu0 0
        %1021 = vmatpush.bf16.msra.mxu0 0
        %1022 = vmatpush.bf16.msra.mxu0 0
        %1023 = vmatpush.bf16.msra.mxu0 0
        %1024 = vmatpush.bf16.msra.mxu0 0
        %1025 = vmatpush.bf16.msra.mxu0 0
        %1026 = vmatpush.bf16.msra.mxu0 0
        %1027 = vmatpush.bf16.msra.mxu0 %v1015
        %1028 = vmatmul.bf16.gmra.mxu0 %v1018
        %v1029 = vpop.f32.mrf.mxu0
        %v1030 = vadd.f32 0.0, %v1029
        %v1031 = vpop.f32.mrf.mxu0
        %v1032 = vadd.f32 0.0, %v1031
        %1033 = vdwg.mxu0
        %v1036 = vunpack.c.l.b16 %v1000
        %v1037 = vunpack.c.l.b16 %v1001
        %v1038 = vpack.c.b16 %v1037, %v1036
        %v1041 = vunpack.c.l.b16 %v696
        %v1042 = vunpack.c.l.b16 %v697
        %v1043 = vpack.c.b16 %v1042, %v1041
        %v1046 = vsel %vm867, %v1038, 0
        %1048 = vmatpush.bf16.msra.mxu0 0
        %1049 = vmatpush.bf16.msra.mxu0 0
        %1050 = vmatpush.bf16.msra.mxu0 0
        %1051 = vmatpush.bf16.msra.mxu0 0
        %1052 = vmatpush.bf16.msra.mxu0 0
        %1053 = vmatpush.bf16.msra.mxu0 0
        %1054 = vmatpush.bf16.msra.mxu0 0
        %1055 = vmatpush.bf16.msra.mxu0 %v1043
        %1056 = vmatmul.bf16.gmra.mxu0 %v1046
        %v1057 = vpop.f32.mrf.mxu0
        %v1058 = vadd.f32 0.0, %v1057
        %v1059 = vpop.f32.mrf.mxu0
        %v1060 = vadd.f32 0.0, %v1059
        %1061 = vdwg.mxu0
        %v1064 = vunpack.c.l.b16 %v1002
        %v1065 = vunpack.c.l.b16 %v1003
        %v1066 = vpack.c.b16 %v1065, %v1064
        %v1069 = vunpack.c.l.b16 %v698
        %v1070 = vunpack.c.l.b16 %v699
        %v1071 = vpack.c.b16 %v1070, %v1069
        %v1074 = vsel %vm867, %v1066, 0
        %1076 = vmatpush.bf16.msra.mxu0 0
        %1077 = vmatpush.bf16.msra.mxu0 0
        %1078 = vmatpush.bf16.msra.mxu0 0
        %1079 = vmatpush.bf16.msra.mxu0 0
        %1080 = vmatpush.bf16.msra.mxu0 0
        %1081 = vmatpush.bf16.msra.mxu0 0
        %1082 = vmatpush.bf16.msra.mxu0 0
        %1083 = vmatpush.bf16.msra.mxu0 %v1071
        %1084 = vmatmul.bf16.gmra.mxu0 %v1074
        %v1085 = vpop.f32.mrf.mxu0
        %v1086 = vadd.f32 0.0, %v1085
        %v1087 = vpop.f32.mrf.mxu0
        %v1088 = vadd.f32 0.0, %v1087
        %1089 = vdwg.mxu0
        %v1092 = vunpack.c.l.b16 %v1004
        %v1093 = vunpack.c.l.b16 %v1005
        %v1094 = vpack.c.b16 %v1093, %v1092
        %v1097 = vunpack.c.l.b16 %v700
        %v1098 = vunpack.c.l.b16 %v701
        %v1099 = vpack.c.b16 %v1098, %v1097
        %v1102 = vsel %vm867, %v1094, 0
        %1104 = vmatpush.bf16.msra.mxu0 0
        %1105 = vmatpush.bf16.msra.mxu0 0
        %1106 = vmatpush.bf16.msra.mxu0 0
        %1107 = vmatpush.bf16.msra.mxu0 0
        %1108 = vmatpush.bf16.msra.mxu0 0
        %1109 = vmatpush.bf16.msra.mxu0 0
        %1110 = vmatpush.bf16.msra.mxu0 0
        %1111 = vmatpush.bf16.msra.mxu0 %v1099
        %1112 = vmatmul.bf16.gmra.mxu0 %v1102
        %v1113 = vpop.f32.mrf.mxu0
        %v1114 = vadd.f32 0.0, %v1113
        %v1115 = vpop.f32.mrf.mxu0
        %v1116 = vadd.f32 0.0, %v1115
        %1117 = vdwg.mxu0
        %v1118 = vpack.c.bf16 %v1030, %v1030
        %v1119 = vpack.c.bf16 %v1032, %v1032
        %v1120 = vpack.c.bf16 %v1058, %v1058
        %v1121 = vpack.c.bf16 %v1060, %v1060
        %v1122 = vpack.c.bf16 %v1086, %v1086
        %v1123 = vpack.c.bf16 %v1088, %v1088
        %v1124 = vpack.c.bf16 %v1114, %v1114
        %v1125 = vpack.c.bf16 %v1116, %v1116
        %v1126 = vld [vmem:[#allocation8] sm:$0xf]
        %v1127 = vld [vmem:[#allocation8 + $0x4] sm:$0xf]
        %v1128 = vld [vmem:[#allocation8 + $0x8] sm:$0xf]
        %v1129 = vld [vmem:[#allocation8 + $0xc] sm:$0xf]
        %v1132 = vunpack.c.l.b16 %v1118
        %v1133 = vunpack.c.l.b16 %v1119
        %v1134 = vpack.c.b16 %v1133, %v1132
        %v1136 = vsel %vm756, %v1134, 0
        %vm1138 = vcmask 1043456
        %v1140 = vsel %vm1138, %v1126, 0
        %1142 = vmatpush.bf16.msra.mxu0 0
        %1143 = vmatpush.bf16.msra.mxu0 0
        %1144 = vmatpush.bf16.msra.mxu0 0
        %1145 = vmatpush.bf16.msra.mxu0 0
        %1146 = vmatpush.bf16.msra.mxu0 0
        %1147 = vmatpush.bf16.msra.mxu0 0
        %1148 = vmatpush.bf16.msra.mxu0 0
        %1149 = vmatpush.bf16.msra.mxu0 %v1140
        %1150 = vmatmul.bf16.gmra.mxu0 %v1136
        %v1151 = vpop.f32.mrf.mxu0
        %v1152 = vadd.f32 0.0, %v1151
        %v1153 = vpop.f32.mrf.mxu0
        %v1154 = vadd.f32 0.0, %v1153
        %1155 = vdwg.mxu0
        %v1158 = vunpack.c.l.b16 %v1120
        %v1159 = vunpack.c.l.b16 %v1121
        %v1160 = vpack.c.b16 %v1159, %v1158
        %v1162 = vsel %vm756, %v1160, 0
        %v1165 = vsel %vm1138, %v1127, 0
        %1167 = vmatpush.bf16.msra.mxu0 0
        %1168 = vmatpush.bf16.msra.mxu0 0
        %1169 = vmatpush.bf16.msra.mxu0 0
        %1170 = vmatpush.bf16.msra.mxu0 0
        %1171 = vmatpush.bf16.msra.mxu0 0
        %1172 = vmatpush.bf16.msra.mxu0 0
        %1173 = vmatpush.bf16.msra.mxu0 0
        %1174 = vmatpush.bf16.msra.mxu0 %v1165
        %1175 = vmatmul.bf16.gmra.mxu0 %v1162
        %v1176 = vpop.f32.mrf.mxu0
        %v1177 = vadd.f32 0.0, %v1176
        %v1178 = vpop.f32.mrf.mxu0
        %v1179 = vadd.f32 0.0, %v1178
        %1180 = vdwg.mxu0
        %v1183 = vunpack.c.l.b16 %v1122
        %v1184 = vunpack.c.l.b16 %v1123
        %v1185 = vpack.c.b16 %v1184, %v1183
        %v1187 = vsel %vm756, %v1185, 0
        %v1190 = vsel %vm1138, %v1128, 0
        %1192 = vmatpush.bf16.msra.mxu0 0
        %1193 = vmatpush.bf16.msra.mxu0 0
        %1194 = vmatpush.bf16.msra.mxu0 0
        %1195 = vmatpush.bf16.msra.mxu0 0
        %1196 = vmatpush.bf16.msra.mxu0 0
        %1197 = vmatpush.bf16.msra.mxu0 0
        %1198 = vmatpush.bf16.msra.mxu0 0
        %1199 = vmatpush.bf16.msra.mxu0 %v1190
        %1200 = vmatmul.bf16.gmra.mxu0 %v1187
        %v1201 = vpop.f32.mrf.mxu0
        %v1202 = vadd.f32 0.0, %v1201
        %v1203 = vpop.f32.mrf.mxu0
        %v1204 = vadd.f32 0.0, %v1203
        %1205 = vdwg.mxu0
        %v1208 = vunpack.c.l.b16 %v1124
        %v1209 = vunpack.c.l.b16 %v1125
        %v1210 = vpack.c.b16 %v1209, %v1208
        %v1212 = vsel %vm756, %v1210, 0
        %v1215 = vsel %vm1138, %v1129, 0
        %1217 = vmatpush.bf16.msra.mxu0 0
        %1218 = vmatpush.bf16.msra.mxu0 0
        %1219 = vmatpush.bf16.msra.mxu0 0
        %1220 = vmatpush.bf16.msra.mxu0 0
        %1221 = vmatpush.bf16.msra.mxu0 0
        %1222 = vmatpush.bf16.msra.mxu0 0
        %1223 = vmatpush.bf16.msra.mxu0 0
        %1224 = vmatpush.bf16.msra.mxu0 %v1215
        %1225 = vmatmul.bf16.gmra.mxu0 %v1212
        %v1226 = vpop.f32.mrf.mxu0
        %v1227 = vadd.f32 0.0, %v1226
        %v1228 = vpop.f32.mrf.mxu0
        %v1229 = vadd.f32 0.0, %v1228
        %1230 = vdwg.mxu0
        %v1231 = vsel %vm526, %v1152, 0.0
        %v1232 = vsel %vm526, %v1177, 0.0
        %v1233 = vadd.f32 %v1231, %v1232
        %v1234 = vsel %vm526, %v1202, 0.0
        %v1235 = vadd.f32 %v1233, %v1234
        %v1236 = vsel %vm526, %v1227, 0.0
        %v1237 = vadd.f32 %v1235, %v1236
        %v1238 = vsel %vm526, %v1154, 0.0
        %v1239 = vsel %vm526, %v1179, 0.0
        %v1240 = vadd.f32 %v1238, %v1239
        %v1241 = vsel %vm526, %v1204, 0.0
        %v1242 = vadd.f32 %v1240, %v1241
        %v1243 = vsel %vm526, %v1229, 0.0
        %v1244 = vadd.f32 %v1242, %v1243
        %v1245 = vld [vmem:[%s6] sm:$0xf]
        %v1246 = vld [vmem:[%s6 + $0x4] sm:$0xf]
        %v1247 = vld [vmem:[%s6 + $0x8] sm:$0xf]
        %v1248 = vld [vmem:[%s6 + $0xc] sm:$0xf]
        %v1253 = vunpack.c.l.b16 %v1245
        %v1254 = vunpack.c.l.b16 %v1246
        %v1255 = vunpack.c.l.b16 %v1247
        %v1256 = vunpack.c.l.b16 %v1248
        %v1257 = vpack.c.b16 %v1254, %v1253
        %v1258 = vpack.c.b16 %v1256, %v1255
        %1261 = vmatpush.bf16.msra.mxu0 0
        %1262 = vmatpush.bf16.msra.mxu0 0
        %1263 = vmatpush.bf16.msra.mxu0 0
        %1264 = vmatpush.bf16.msra.mxu0 0
        %1265 = vmatpush.bf16.msra.mxu0 0
        %1266 = vmatpush.bf16.msra.mxu0 0
        %1267 = vmatpush.bf16.msra.mxu0 %v1258
        %1268 = vmatpush.bf16.msra.mxu0 %v1257
        %1269 = vmatmul.bf16.gmra.mxu0 %v528
        %v1270 = vpop.f32.mrf.mxu0
        %v1271 = vadd.f32 %v1237, %v1270
        %v1272 = vpop.f32.mrf.mxu0
        %v1273 = vadd.f32 %v1244, %v1272
        %1274 = vdwg.mxu0
        %v1275 = vld [vmem:[%s7] sm:$0x1]
        %v1276 = vperm.slane %v1275, 0
        %v1277 = vadd.f32 %v1271, %v1276
        %v1278 = vadd.f32 %v1273, %v1276
        %v1279 = vsel %vm526, %v1277, 0.0
        %1280 = vadd.xlane.f32.xlu0 %v1279
        %v1281 = vpop.xlane.xlu0 %1280
        %v1282 = vsel %vm526, %v1278, 0.0
        %1283 = vadd.xlane.f32.xlu0 %v1282
        %v1284 = vpop.xlane.xlu0 %1283
        %v1285 = vrcp.pop 32.0
        %v1286 = vmul.f32 32.0, %v1285
        %v1287 = vsub.f32 1.0, %v1286
        %v1288 = vmul.f32 %v1285, %v1287
        %v1289 = vadd.f32 %v1285, %v1288
        %vm1290 = vweird.f32 %v1285
        %v1291 = vsel %vm1290, %v1285, %v1289
        %v1292 = vmul.f32 %v1281, %v1291
        %v1293 = vmul.f32 %v1284, %v1291
        %v1294 = vsub.f32 %v1277, %v1292
        %v1295 = vsub.f32 %v1278, %v1293
        %v1296 = vmul.f32 %v1294, %v1294
        %v1297 = vmul.f32 %v1295, %v1295
        %v1298 = vsel %vm526, %v1296, 0.0
        %1299 = vadd.xlane.f32.xlu0 %v1298
        %v1300 = vpop.xlane.xlu0 %1299
        %v1301 = vsel %vm526, %v1297, 0.0
        %1302 = vadd.xlane.f32.xlu0 %v1301
        %v1303 = vpop.xlane.xlu0 %1302
        %v1304 = vmul.f32 %v1300, %v1291
        %v1305 = vmul.f32 %v1303, %v1291
        %v1306 = vadd.f32 %v1304, 1e-05
        %v1307 = vadd.f32 %v1305, 1e-05
        %v1308 = vrsqrt.pop %v1306
        %v1309 = vmul.f32 %v1308, %v1306
        %v1310 = vmul.f32 %v1309, %v1308
        %v1311 = vmul.f32 0.5, %v1310
        %v1312 = vsub.f32 1.5, %v1311
        %v1313 = vmul.f32 %v1308, %v1312
        %vm1314 = vweird.f32 %v1306
        %vm1315 = vweird.f32 %v1308
        %vm1316 = vmor %vm1314, %vm1315
        %v1317 = vsel %vm1316, %v1308, %v1313
        %v1318 = vrsqrt.pop %v1307
        %v1319 = vmul.f32 %v1318, %v1307
        %v1320 = vmul.f32 %v1319, %v1318
        %v1321 = vmul.f32 0.5, %v1320
        %v1322 = vsub.f32 1.5, %v1321
        %v1323 = vmul.f32 %v1318, %v1322
        %vm1324 = vweird.f32 %v1307
        %vm1325 = vweird.f32 %v1318
        %vm1326 = vmor %vm1324, %vm1325
        %v1327 = vsel %vm1326, %v1318, %v1323
        %v1328 = vmul.f32 %v1294, %v1317
        %v1329 = vmul.f32 %v1295, %v1327
        %v1330 = vld [vmem:[%s7 + $0x1] sm:$0x1]
        %v1331 = vperm.slane %v1330, 0
        %v1332 = vmul.f32 %v1328, %v1331
        %v1333 = vmul.f32 %v1329, %v1331
        %v1334 = vld [vmem:[%s7 + $0x2] sm:$0x1]
        %v1335 = vperm.slane %v1334, 0
        %v1336 = vadd.f32 %v1332, %v1335
        %v1337 = vadd.f32 %v1333, %v1335
        %v1338 = vmax.f32 %v1336, 0.0
        %v1339 = vmax.f32 %v1337, 0.0
        %v1340 = vpack.c.bf16 %v1339, %v1338
        %s1341 = scalar_lea.vmem %s6, 16
        %v1342 = vld [vmem:[%s1341] sm:$0xf]
        %v1343 = vld [vmem:[%s1341 + $0x4] sm:$0xf]
        %v1344 = vld [vmem:[%s1341 + $0x8] sm:$0xf]
        %v1345 = vld [vmem:[%s1341 + $0xc] sm:$0xf]
        %v1346 = vld [vmem:[%s7 + $0x3] sm:$0x1]
        %v1347 = vperm.slane %v1346, 0
        %v1352 = vunpack.c.l.b16 %v1342
        %v1353 = vunpack.c.l.b16 %v1343
        %v1354 = vunpack.c.l.b16 %v1344
        %v1355 = vunpack.c.l.b16 %v1345
        %v1356 = vpack.c.b16 %v1353, %v1352
        %v1357 = vpack.c.b16 %v1355, %v1354
        %v1361 = vsel %vm526, %v1340, 0
        %1363 = vmatpush.bf16.msra.mxu0 0
        %1364 = vmatpush.bf16.msra.mxu0 0
        %1365 = vmatpush.bf16.msra.mxu0 0
        %1366 = vmatpush.bf16.msra.mxu0 0
        %1367 = vmatpush.bf16.msra.mxu0 0
        %1368 = vmatpush.bf16.msra.mxu0 0
        %1369 = vmatpush.bf16.msra.mxu0 %v1357
        %1370 = vmatpush.bf16.msra.mxu0 %v1356
        %1371 = vmatmul.bf16.gmra.mxu0 %v1361
        %v1372 = vpop.f32.mrf.mxu0
        %v1373 = vadd.f32 %v1347, %v1372
        %v1374 = vpop.f32.mrf.mxu0
        %v1375 = vadd.f32 %v1347, %v1374
        %1376 = vdwg.mxu0
        %1377 = vst.msk [vmem:[%s477] sm:$0xff] %vm526, %v1373
        %1378 = vst.msk [vmem:[%s477 + $0x8] sm:$0xff] %vm526, %v1375
        %s1379 = sand.u32 %s243, 1
        %s1380 = scalar_lea.sflag [#allocation4], %s1379
        %s1381 = sand.u32 %s243, 1
        %s1382 = smul.addr %s1381, 16
        %s1383 = scalar_lea.vmem [#allocation10], %s1382
        %s1384 = sand.u32 %s271, 1
        %s1385 = scalar_lea.sflag [#allocation12], %s1384
        %s1386 = sand.u32 %s271, 1
        %s1387 = smul.addr %s1386, 16
        %s1388 = scalar_lea.vmem [#allocation11], %s1387
        // Predicated region
        $region69: #{tpu_custom_call.1} parent=51 // pred_check
          %p1389 = pneg %p253
        $region70: #{tpu_custom_call.1} parent=51 // pred_check_branch
          %1391 = sbr.rel (%p1389) target = $region72
        $region71: #{tpu_custom_call.1} parent=51 // pred_region
          %s1392 = smul.u32 2, %s39
          %1394 = vsyncadd %s1380, 0
          %s1395 = smul.addr %s38, 2
          %s1396 = sadd.s32 %s1392, %s1395
          %s1397 = smul.addr %s1396, 8
          %s1398 = scalar_lea.hbm %s8, %s1397
          %s1399 = sshll.u32 %s1383, 4
          %s1400 = int_to_ptr.vmem [resolvable:$true] %s1399
          %s1401 = sshll.u32 %s1398, 4
          %s1402 = int_to_ptr.hbm [resolvable:$true] %s1401
          %1407 = dma.vmem_to_hbm [thread:$0]  %s1400, 256, %s1402, %s1380, 128, 128, 8
        $region72: #{tpu_custom_call.1} parent=51 // pred_fallthru
          _
        // Predicated region
        $region73: #{tpu_custom_call.1} parent=51 // pred_check
          %p1408 = pneg %p281
        $region74: #{tpu_custom_call.1} parent=51 // pred_check_branch
          %1410 = sbr.rel (%p1408) target = $region76
        $region75: #{tpu_custom_call.1} parent=51 // pred_region
          %s1411 = smul.u32 2, %s39
          %1413 = vsyncadd %s1385, 0
          %s1414 = smul.addr %s38, 2
          %s1415 = sadd.s32 %s1411, %s1414
          %s1416 = smul.addr %s1415, 8
          %s1417 = scalar_lea.hbm %s9, %s1416
          %s1418 = sshll.u32 %s1388, 4
          %s1419 = int_to_ptr.vmem [resolvable:$true] %s1418
          %s1420 = sshll.u32 %s1417, 4
          %s1421 = int_to_ptr.hbm [resolvable:$true] %s1420
          %1426 = dma.vmem_to_hbm [thread:$0]  %s1419, 256, %s1421, %s1385, 128, 128, 8
        $region76: #{tpu_custom_call.1} parent=51 // pred_fallthru
          _
      $region52: #{tpu_custom_call.1} parent=5 // pred_fallthru
        _
      %p1427 = scmp.le.s32.totalorder 2, %s29
      // Predicated region
      $region77: #{tpu_custom_call.1} parent=5 // pred_check
        %p1428 = pneg %p1427
      $region78: #{tpu_custom_call.1} parent=5 // pred_check_branch
        %1430 = sbr.rel (%p1428) target = $region80
      $region79: #{tpu_custom_call.1} parent=5 // pred_region
        %s1431 = ssub.s32 %s29, 2
        // Predicated region
        $region81: #{tpu_custom_call.1} parent=79 // pred_check
          %p1432 = pneg %p259
        $region82: #{tpu_custom_call.1} parent=79 // pred_check_branch
          %1434 = sbr.rel (%p1432) target = $region84
        $region83: #{tpu_custom_call.1} parent=79 // pred_region
          %s1435 = sand.u32 %s244, 1
          %s1436 = scalar_lea.sflag [#allocation4], %s1435
          %s1437 = sand.u32 %s244, 1
          %s1438 = smul.addr %s1437, 16
          %s1439 = scalar_lea.vmem [#allocation10], %s1438
          %1441 = dma.done %s1436, 256
        $region84: #{tpu_custom_call.1} parent=79 // pred_fallthru
          _
        // Predicated region
        $region85: #{tpu_custom_call.1} parent=79 // pred_check
          %p1442 = pneg %p287
        $region86: #{tpu_custom_call.1} parent=79 // pred_check_branch
          %1444 = sbr.rel (%p1442) target = $region88
        $region87: #{tpu_custom_call.1} parent=79 // pred_region
          %s1445 = sand.u32 %s272, 1
          %s1446 = scalar_lea.sflag [#allocation12], %s1445
          %s1447 = sand.u32 %s272, 1
          %s1448 = smul.addr %s1447, 16
          %s1449 = scalar_lea.vmem [#allocation11], %s1448
          %1451 = dma.done %s1446, 256
        $region88: #{tpu_custom_call.1} parent=79 // pred_fallthru
          _
      $region80: #{tpu_custom_call.1} parent=5 // pred_fallthru
        _
    $region6: #{tpu_custom_call.1} parent=1 // loop_footer
      %s33 = sadd.s32 1, %s29
    $region7: #{tpu_custom_call.1} parent=1 // loop_footer_branch
      %28 = sbr.rel target = $region3
    $region8: #{tpu_custom_call.1} parent=1 // loop_exit
      _
    %1452 = vsyncpa [#allocation3], 1
    %s1453 = scalar_lea.sflag [#allocation3], 1
    %1454 = vsyncpa %s1453, 1
    %1455 = vsyncpa [#allocation6], 1
    %s1456 = scalar_lea.sflag [#allocation6], 1
    %1457 = vsyncpa %s1456, 1
    %1458 = vsyncpa [#allocation9], 1
    %1459 = vsyncpa [#allocation4], 1
    %s1460 = scalar_lea.sflag [#allocation4], 1
    %1461 = vsyncpa %s1460, 1
    %1462 = vsyncpa [#allocation12], 1
    %s1463 = scalar_lea.sflag [#allocation12], 1
    %1464 = vsyncpa %s1463, 1

</llo_original>
